<compile_context>
chip_gen: v7x
topology: tpu7x:2x2x1
jax: 0.10.0
libtpu: 0.0.40
codegen_flags: <defaults>
</compile_context>

<pallas_src>
import functools

import jax
import jax.numpy as jnp
from jax.experimental import pallas as pl
from jax.experimental.pallas import tpu as pltpu


def _shift_cols(x, s):
    """y[..., q] = x[..., q + s]; zero where q + s is out of range (s is static)."""
    if s == 0:
        return x
    n = x.shape[-1]
    pad = jnp.zeros(x.shape[:-1] + (abs(s),), x.dtype)
    if s > 0:
        return jnp.concatenate([x[..., s:], pad], axis=-1)
    return jnp.concatenate([pad, x[..., :n + s]], axis=-1)


def _sigmoid(x):
    # exp goes to the EUP slot; exact divide keeps the tightened f32 check meaningful
    # (pl.reciprocal(approx=True) would be a free-slot micro-opt but perturbs the gates).
    return 1.0 / (1.0 + jnp.exp(-x))


def _fused_kernel(C, H, W, Nb,
                  up_ref, down_ref,
                  wcat_ref, b_ref, fc1w_ref, fc1b_ref, fc2w_ref, fc2b_ref,
                  wmat_ref, pool_ref, expand_ref, row_ref, col_ref,
                  out_ref):
    f32 = jnp.float32

    # Lane-batched activations: (C, Lb) with Lb = Nb*H*W (Nb images side by side on the
    # lane axis).  `inp` never round-trips through HBM; upcast once, all math in f32.
    inp = up_ref[...].astype(f32) * down_ref[...].astype(f32)          # (C, Lb)

    # ---- squeeze-excite branch (per-image pool via block-diagonal ones matmul) ------
    pooled = jnp.dot(inp, pool_ref[...], preferred_element_type=f32)   # (C, Nb)
    h = jnp.dot(fc1w_ref[...], pooled, preferred_element_type=f32) + fc1b_ref[...]
    h = jnp.maximum(h, 0.0)                                            # ReLU
    se = _sigmoid(jnp.dot(fc2w_ref[...], h, preferred_element_type=f32)
                  + fc2b_ref[...])                                     # (C, Nb)
    se_full = jnp.dot(se, expand_ref[...], preferred_element_type=f32)  # (C, Lb)

    # ---- spatial-attention branch: ChannelPool + 7x7 SAME conv + sigmoid ------------
    maxp = jnp.max(inp, axis=0, keepdims=True)
    meanp = jnp.sum(inp, axis=0, keepdims=True) * (1.0 / C)
    pool2 = jnp.concatenate([maxp, meanp], axis=0)                     # (2, Lb)

    row = row_ref[...]                                                 # (1, Lb) int32
    col = col_ref[...]                                                 # (1, Lb) int32

    # 7 row shifts of the stacked max/mean planes, built in registers (no VMEM scratch).
    # The row mask is SAME height padding AND prevents cross-image leakage on the
    # lane-concatenated layout.
    planes = []
    for dy in range(7):
        s = dy - 3
        if s == 0:
            planes.append(pool2)
        else:
            rsrc = row + s
            valid = jnp.logical_and(rsrc >= 0, rsrc < H)
            planes.append(jnp.where(valid, _shift_cols(pool2, s * W), 0.0))
    planes = jnp.concatenate(planes, axis=0)                           # (14, Lb)

    # All 49 taps x {max, mean} collapse into one small MXU matmul.
    b_all = jnp.dot(wmat_ref[...], planes, preferred_element_type=f32)  # (7, Lb)

    conv = None
    for dx in range(7):
        s = dx - 3
        term = b_all[dx:dx + 1, :]
        if s != 0:
            csrc = col + s
            valid = jnp.logical_and(csrc >= 0, csrc < W)               # width mask
            term = jnp.where(valid, _shift_cols(term, s), 0.0)
        conv = term if conv is None else conv + term
    sig = _sigmoid(conv)                                               # (1, Lb)

    # ---- pointwise stage: ONE K=3C MXU matmul (conv-branch + skip folded into W_cat) -
    x_cat = jnp.concatenate([inp, se_full * inp, sig * inp], axis=0)   # (3C, Lb)
    out = jnp.dot(wcat_ref[...], x_cat, preferred_element_type=f32) + b_ref[...]
    out_ref[...] = out.astype(out_ref.dtype)                           # lane-dense slab


def _pick_batch_block(N, C, HW, itemsize, max_nb=32, target_bytes=1 << 20):
    """Largest divisor of N s.t. the activation block stays modest, the block-diagonal
    pool/expand operands stay tiny (Nb capped), and the grid keeps >= 2 steps whenever
    N >= 2 so both v7x TensorCores get work (no-op on v5e/v6e)."""
    best = 1
    for nb in range(1, min(N, max_nb) + 1):
        if N % nb:
            continue
        if N >= 2 and N // nb < 2:
            continue
        if nb * C * HW * itemsize <= target_bytes:
            best = nb
    return best


def fuse_parallel_forward(up, down, params, *, compute_dtype=jnp.float32,
                          out_dtype=None, batch_block=None):
    """up, down: (N, C, H, W) float32 (NCHW, as in PyTorch). Returns (N, out_c, H, W)."""
    N, C, H, W = up.shape
    HW = H * W
    out_c = params['fuse_b'].shape[-1]
    f32 = jnp.float32
    hi = jax.lax.Precision.HIGHEST
    out_dtype = out_dtype or compute_dtype

    Nb = batch_block or _pick_batch_block(N, C, HW, jnp.dtype(compute_dtype).itemsize)
    assert N % Nb == 0
    Lb = Nb * HW

    # ---- one-time weight folding / transposition (pure JAX, tiny) -------------------
    Wf = params['fuse_w'].astype(f32)                                  # (3C, out_c)
    w0t = (jnp.dot(params['conv_w'], Wf[:C], precision=hi) + params['skip_w']).T
    w1t = Wf[C:2 * C].T
    w2t = Wf[2 * C:3 * C].T
    wcat = jnp.concatenate([w0t, w1t, w2t], axis=1).astype(f32)        # (out_c, 3C)
    bt = (jnp.dot(params['conv_b'], Wf[:C], precision=hi)
          + params['fuse_b']).T.astype(f32)                            # (out_c, 1)
    fc1w = params['fc1_w'].T.astype(f32)                               # (mid, C)
    fc1b = params['fc1_b'].T.astype(f32)                               # (mid, 1)
    fc2w = params['fc2_w'].T.astype(f32)                               # (C, mid)
    fc2b = params['fc2_b'].T.astype(f32)                               # (C, 1)
    # wmat[dx, 2*dy + c] = w_spatial[c, dy, dx]  (c: 0 = max plane, 1 = mean plane)
    wmat = jnp.transpose(params['w_spatial'], (2, 1, 0)).reshape(7, 14).astype(f32)

    # Hoisted constants: block-diagonal pool / expand matrices (SE pool and gate
    # broadcast become (C, Nb)-wide MXU matmuls) and per-lane image row/col indices
    # for the 7x7 shift masks.
    eye = jnp.eye(Nb, dtype=f32)
    pool_mat = jnp.repeat(eye, HW, axis=0) * (1.0 / HW)                # (Lb, Nb)
    expand_mat = jnp.repeat(eye, HW, axis=1)                           # (Nb, Lb)
    lane = jnp.arange(Lb, dtype=jnp.int32)
    row_idx = ((lane % HW) // W).reshape(1, Lb)
    col_idx = (lane % W).reshape(1, Lb)

    weights = [wcat, bt, fc1w, fc1b, fc2w, fc2b, wmat, pool_mat, expand_mat,
               row_idx, col_idx]

    # Lane-concatenated channels-first activations (C, N*HW); cast at the boundary
    # (bf16 halves HBM bytes of the two dominant inputs; math stays f32 in-kernel).
    up_cl = jnp.transpose(up.reshape(N, C, HW), (1, 0, 2)).reshape(C, N * HW)
    down_cl = jnp.transpose(down.reshape(N, C, HW), (1, 0, 2)).reshape(C, N * HW)
    up_cl = up_cl.astype(compute_dtype)
    down_cl = down_cl.astype(compute_dtype)

    def w_spec(w):
        return pl.BlockSpec(w.shape, lambda i, _nd=w.ndim: (0,) * _nd)

    out_flat = pl.pallas_call(
        functools.partial(_fused_kernel, C, H, W, Nb),
        grid=(N // Nb,),
        in_specs=[pl.BlockSpec((C, Lb), lambda i: (0, i)),
                  pl.BlockSpec((C, Lb), lambda i: (0, i))]
                 + [w_spec(w) for w in weights],
        out_specs=pl.BlockSpec((out_c, Lb), lambda i: (0, i)),
        out_shape=jax.ShapeDtypeStruct((out_c, N * HW), out_dtype),
        compiler_params=pltpu.CompilerParams(dimension_semantics=("parallel",)),
    )(up_cl, down_cl, *weights)

    return jnp.transpose(out_flat.reshape(out_c, N, H, W), (1, 0, 2, 3))


# -----------------------------------------------------------------------------------
# Deterministic parameter init (synthetic — shapes from the module __init__)
# -----------------------------------------------------------------------------------
def init_params(key, in_c, out_c):
    mid = in_c // 4
    ks = jax.random.split(key, 10)
    s = 0.1
    p = {
        'fc1_w': jax.random.normal(ks[0], (in_c, mid), jnp.float32) * s,
        'fc1_b': jax.random.normal(ks[1], (1, mid), jnp.float32) * s,
        'fc2_w': jax.random.normal(ks[2], (mid, in_c), jnp.float32) * s,
        'fc2_b': jax.random.normal(ks[3], (1, in_c), jnp.float32) * s,
        'w_spatial': jax.random.normal(ks[4], (2, 7, 7), jnp.float32) * s,  # no bias
        'conv_w': jax.random.normal(ks[5], (in_c, in_c), jnp.float32) * s,
        'conv_b': jax.random.normal(ks[6], (1, in_c), jnp.float32) * s,
        'fuse_w': jax.random.normal(ks[7], (3 * in_c, out_c), jnp.float32) * s,
        'fuse_b': jax.random.normal(ks[8], (1, out_c), jnp.float32) * s,
    }
    if in_c == out_c:
        p['skip_w'] = jnp.eye(in_c, dtype=jnp.float32)                 # nn.Identity
    else:
        p['skip_w'] = jax.random.normal(ks[9], (in_c, out_c), jnp.float32) * s
    return p


# -----------------------------------------------------------------------------------
# Pure-JAX reference (NCHW, highest matmul precision) for the correctness checks
# -----------------------------------------------------------------------------------
def reference_forward(up, down, p):
    hi = jax.lax.Precision.HIGHEST
    inp = up * down                                                    # (N, C, H, W)
    pooled = jnp.mean(inp, axis=(2, 3), keepdims=True)                 # (N, C, 1, 1)
    h = jax.nn.relu(jnp.einsum('nchw,cd->ndhw', pooled, p['fc1_w'], precision=hi)
                    + p['fc1_b'][0, :, None, None])
    se = jax.nn.sigmoid(jnp.einsum('nchw,cd->ndhw', h, p['fc2_w'], precision=hi)
                        + p['fc2_b'][0, :, None, None])
    x_se = se * inp
    comp = jnp.concatenate([jnp.max(inp, axis=1, keepdims=True),
                            jnp.mean(inp, axis=1, keepdims=True)], axis=1)
    ker = p['w_spatial'][None]                                         # (1, 2, 7, 7) OIHW
    sp = jax.lax.conv_general_dilated(
        comp, ker, (1, 1), 'SAME',
        dimension_numbers=('NCHW', 'OIHW', 'NCHW'), precision=hi)
    x_sp = jax.nn.sigmoid(sp) * inp
    x_conv = (jnp.einsum('nchw,cd->ndhw', inp, p['conv_w'], precision=hi)
              + p['conv_b'][0, :, None, None])
    cat = jnp.concatenate([x_conv, x_se, x_sp], axis=1)
    fuse = (jnp.einsum('nchw,cd->ndhw', cat, p['fuse_w'], precision=hi)
            + p['fuse_b'][0, :, None, None])
    skip = jnp.einsum('nchw,cd->ndhw', inp, p['skip_w'], precision=hi)
    return skip + fuse


if __name__ == "__main__":
    key = jax.random.PRNGKey(0)
    kup, kdn, kpar = jax.random.split(key, 3)

    N, C, H, W = 2, 8, 16, 16     # in_c = 8, spatial = (16, 16)
    out_c = 8                     # in_c == out_c -> skip = Identity

    up = jax.random.normal(kup, (N, C, H, W), jnp.float32)
    down = jax.random.normal(kdn, (N, C, H, W), jnp.float32)
    params = init_params(kpar, C, out_c)

    # --- f32 I/O path (Nb = 1, grid = 2) ---------------------------------------------
    out32 = jax.block_until_ready(fuse_parallel_forward(up, down, params))
    assert out32.shape == (N, out_c, H, W)
    ref = reference_forward(up, down, params)
    # Tightened vs the previous 2e-2 (review note).  Not ~1e-5 because the reference's
    # XLA dots/conv and the in-kernel MXU f32 dots use different contraction orders /
    # default precisions (conv+skip weights are folded in the kernel).
    if not jnp.allclose(out32, ref, atol=1e-2, rtol=1e-2):
        raise AssertionError(
            f"f32 mismatch vs reference, max abs diff={float(jnp.max(jnp.abs(out32 - ref)))}")

    # --- lane-batched path (Nb > 1 exercises the cross-image shift masks) -------------
    N2 = 8
    kup2, kdn2 = jax.random.split(jax.random.PRNGKey(1), 2)
    up2 = jax.random.normal(kup2, (N2, C, H, W), jnp.float32)
    down2 = jax.random.normal(kdn2, (N2, C, H, W), jnp.float32)
    out_b = jax.block_until_ready(fuse_parallel_forward(up2, down2, params))
    ref_b = reference_forward(up2, down2, params)
    if not jnp.allclose(out_b, ref_b, atol=1e-2, rtol=1e-2):
        raise AssertionError(
            f"batched mismatch vs reference, max abs diff={float(jnp.max(jnp.abs(out_b - ref_b)))}")

    # --- bf16 I/O path (halves HBM traffic; math stays f32 in-kernel) -----------------
    out_bf = jax.block_until_ready(
        fuse_parallel_forward(up, down, params, compute_dtype=jnp.bfloat16))
    up_q = up.astype(jnp.bfloat16).astype(jnp.float32)
    down_q = down.astype(jnp.bfloat16).astype(jnp.float32)
    ref_q = reference_forward(up_q, down_q, params)   # same bf16-quantized inputs
    diff_bf = jnp.abs(out_bf.astype(jnp.float32) - ref_q)
    if not jnp.allclose(out_bf.astype(jnp.float32), ref_q, atol=3e-2, rtol=3e-2):
        raise AssertionError(f"bf16 mismatch vs reference, max abs diff={float(jnp.max(diff_bf))}")

    print("KERNEL_OK")
</pallas_src>

<mosaic_0001>
module attributes {stable_mosaic.version = 11 : i64} {
  func.func @_fused_kernel(%arg0: i32, %arg1: memref<8x256xf32, #tpu.memory_space<vmem>>, %arg2: memref<8x256xf32, #tpu.memory_space<vmem>>, %arg3: memref<8x24xf32, #tpu.memory_space<vmem>>, %arg4: memref<8x1xf32, #tpu.memory_space<vmem>>, %arg5: memref<2x8xf32, #tpu.memory_space<vmem>>, %arg6: memref<2x1xf32, #tpu.memory_space<vmem>>, %arg7: memref<8x2xf32, #tpu.memory_space<vmem>>, %arg8: memref<8x1xf32, #tpu.memory_space<vmem>>, %arg9: memref<7x14xf32, #tpu.memory_space<vmem>>, %arg10: memref<256x1xf32, #tpu.memory_space<vmem>>, %arg11: memref<1x256xf32, #tpu.memory_space<vmem>>, %arg12: memref<1x256xi32, #tpu.memory_space<vmem>>, %arg13: memref<1x256xi32, #tpu.memory_space<vmem>>, %arg14: memref<8x256xf32, #tpu.memory_space<vmem>>) attributes {dimension_semantics = [#tpu.dimension_semantics<parallel>], iteration_bounds = array<i64: 2>, scalar_prefetch = 0 : i64, scratch_operands = 0 : i64, tpu.core_type = #tpu.core_type<tc>, window_params = [{transform_indices = @transform_0, window_bounds = array<i64: 8, 256>}, {transform_indices = @transform_1, window_bounds = array<i64: 8, 256>}, {pipeline_mode = #tpu.pipeline_mode<synchronous>, transform_indices = @transform_2, window_bounds = array<i64: 8, 24>}, {pipeline_mode = #tpu.pipeline_mode<synchronous>, transform_indices = @transform_3, window_bounds = array<i64: 8, 1>}, {pipeline_mode = #tpu.pipeline_mode<synchronous>, transform_indices = @transform_4, window_bounds = array<i64: 2, 8>}, {pipeline_mode = #tpu.pipeline_mode<synchronous>, transform_indices = @transform_5, window_bounds = array<i64: 2, 1>}, {pipeline_mode = #tpu.pipeline_mode<synchronous>, transform_indices = @transform_6, window_bounds = array<i64: 8, 2>}, {pipeline_mode = #tpu.pipeline_mode<synchronous>, transform_indices = @transform_7, window_bounds = array<i64: 8, 1>}, {pipeline_mode = #tpu.pipeline_mode<synchronous>, transform_indices = @transform_8, window_bounds = array<i64: 7, 14>}, {pipeline_mode = #tpu.pipeline_mode<synchronous>, transform_indices = @transform_9, window_bounds = array<i64: 256, 1>}, {pipeline_mode = #tpu.pipeline_mode<synchronous>, transform_indices = @transform_10, window_bounds = array<i64: 1, 256>}, {pipeline_mode = #tpu.pipeline_mode<synchronous>, transform_indices = @transform_11, window_bounds = array<i64: 1, 256>}, {pipeline_mode = #tpu.pipeline_mode<synchronous>, transform_indices = @transform_12, window_bounds = array<i64: 1, 256>}, {transform_indices = @transform_13, window_bounds = array<i64: 8, 256>}]} {
    %c0 = arith.constant 0 : index
    %c0_0 = arith.constant 0 : index
    %0 = vector.load %arg1[%c0, %c0_0] : memref<8x256xf32, #tpu.memory_space<vmem>>, vector<8x256xf32>
    %c0_1 = arith.constant 0 : index
    %c0_2 = arith.constant 0 : index
    %1 = vector.load %arg2[%c0_1, %c0_2] : memref<8x256xf32, #tpu.memory_space<vmem>>, vector<8x256xf32>
    %2 = arith.mulf %0, %1 : vector<8x256xf32>
    %c0_3 = arith.constant 0 : index
    %c0_4 = arith.constant 0 : index
    %3 = vector.load %arg10[%c0_3, %c0_4] : memref<256x1xf32, #tpu.memory_space<vmem>>, vector<256x1xf32>
    %cst = arith.constant dense<0.000000e+00> : vector<8x1xf32>
    %4 = tpu.matmul %2, %3, %cst {dimension_numbers = #tpu.dot_dimension_numbers<[1], [0], [0], [1], [0, 0, 1, 1], [], []>} : vector<8x256xf32>, vector<256x1xf32>, vector<8x1xf32> -> vector<8x1xf32>
    %c0_5 = arith.constant 0 : index
    %c0_6 = arith.constant 0 : index
    %5 = vector.load %arg5[%c0_5, %c0_6] : memref<2x8xf32, #tpu.memory_space<vmem>>, vector<2x8xf32>
    %cst_7 = arith.constant dense<0.000000e+00> : vector<2x1xf32>
    %6 = tpu.matmul %5, %4, %cst_7 {dimension_numbers = #tpu.dot_dimension_numbers<[1], [0], [0], [1], [0, 0, 1, 1], [], []>} : vector<2x8xf32>, vector<8x1xf32>, vector<2x1xf32> -> vector<2x1xf32>
    %c0_8 = arith.constant 0 : index
    %c0_9 = arith.constant 0 : index
    %7 = vector.load %arg6[%c0_8, %c0_9] : memref<2x1xf32, #tpu.memory_space<vmem>>, vector<2x1xf32>
    %8 = arith.addf %6, %7 : vector<2x1xf32>
    %cst_10 = arith.constant 0.000000e+00 : f32
    %9 = vector.broadcast %cst_10 : f32 to vector<2x1xf32>
    %10 = arith.maximumf %8, %9 : vector<2x1xf32>
    %c0_11 = arith.constant 0 : index
    %c0_12 = arith.constant 0 : index
    %11 = vector.load %arg7[%c0_11, %c0_12] : memref<8x2xf32, #tpu.memory_space<vmem>>, vector<8x2xf32>
    %cst_13 = arith.constant dense<0.000000e+00> : vector<8x1xf32>
    %12 = tpu.matmul %11, %10, %cst_13 {dimension_numbers = #tpu.dot_dimension_numbers<[1], [0], [0], [1], [0, 0, 1, 1], [], []>} : vector<8x2xf32>, vector<2x1xf32>, vector<8x1xf32> -> vector<8x1xf32>
    %c0_14 = arith.constant 0 : index
    %c0_15 = arith.constant 0 : index
    %13 = vector.load %arg8[%c0_14, %c0_15] : memref<8x1xf32, #tpu.memory_space<vmem>>, vector<8x1xf32>
    %14 = arith.addf %12, %13 : vector<8x1xf32>
    %cst_16 = arith.constant 0.000000e+00 : f32
    %15 = vector.broadcast %cst_16 : f32 to vector<8x1xf32>
    %16 = arith.subf %15, %14 : vector<8x1xf32>
    %17 = math.exp %16 : vector<8x1xf32>
    %cst_17 = arith.constant 1.000000e+00 : f32
    %18 = vector.broadcast %cst_17 : f32 to vector<8x1xf32>
    %19 = arith.addf %18, %17 : vector<8x1xf32>
    %cst_18 = arith.constant 1.000000e+00 : f32
    %20 = vector.broadcast %cst_18 : f32 to vector<8x1xf32>
    %21 = arith.divf %20, %19 : vector<8x1xf32>
    %c0_19 = arith.constant 0 : index
    %c0_20 = arith.constant 0 : index
    %22 = vector.load %arg11[%c0_19, %c0_20] : memref<1x256xf32, #tpu.memory_space<vmem>>, vector<1x256xf32>
    %cst_21 = arith.constant dense<0.000000e+00> : vector<8x256xf32>
    %23 = tpu.matmul %21, %22, %cst_21 {dimension_numbers = #tpu.dot_dimension_numbers<[1], [0], [0], [1], [0, 0, 1, 1], [], []>} : vector<8x1xf32>, vector<1x256xf32>, vector<8x256xf32> -> vector<8x256xf32>
    %cst_22 = arith.constant dense<0xFF800000> : vector<256xf32>
    %24 = vector.multi_reduction <maximumf>, %2, %cst_22 [0] : vector<8x256xf32> to vector<256xf32>
    %25 = vector.shape_cast %24 : vector<256xf32> to vector<1x256xf32>
    %cst_23 = arith.constant dense<0.000000e+00> : vector<256xf32>
    %26 = vector.multi_reduction <add>, %2, %cst_23 [0] : vector<8x256xf32> to vector<256xf32>
    %27 = vector.shape_cast %26 : vector<256xf32> to vector<1x256xf32>
    %cst_24 = arith.constant 1.250000e-01 : f32
    %28 = vector.broadcast %cst_24 : f32 to vector<1x256xf32>
    %29 = arith.mulf %27, %28 : vector<1x256xf32>
    %30 = tpu.concatenate %25, %29 in 0 : vector<1x256xf32>, vector<1x256xf32> -> vector<2x256xf32>
    %c0_25 = arith.constant 0 : index
    %c0_26 = arith.constant 0 : index
    %31 = vector.load %arg12[%c0_25, %c0_26] : memref<1x256xi32, #tpu.memory_space<vmem>>, vector<1x256xi32>
    %c0_27 = arith.constant 0 : index
    %c0_28 = arith.constant 0 : index
    %32 = vector.load %arg13[%c0_27, %c0_28] : memref<1x256xi32, #tpu.memory_space<vmem>>, vector<1x256xi32>
    %c-3_i32 = arith.constant -3 : i32
    %33 = vector.broadcast %c-3_i32 : i32 to vector<1x256xi32>
    %34 = arith.addi %31, %33 : vector<1x256xi32>
    %c0_i32 = arith.constant 0 : i32
    %35 = vector.broadcast %c0_i32 : i32 to vector<1x256xi32>
    %36 = arith.cmpi sge, %34, %35 : vector<1x256xi32>
    %c16_i32 = arith.constant 16 : i32
    %37 = vector.broadcast %c16_i32 : i32 to vector<1x256xi32>
    %38 = arith.cmpi slt, %34, %37 : vector<1x256xi32>
    %39 = arith.andi %36, %38 : vector<1x256xi1>
    %cst_29 = arith.constant 0.000000e+00 : f32
    %40 = vector.broadcast %cst_29 : f32 to vector<2x48xf32>
    %41 = vector.extract_strided_slice %30 {offsets = [0, 0], sizes = [2, 208], strides = [1, 1]} : vector<2x256xf32> to vector<2x208xf32>
    %42 = tpu.concatenate %40, %41 in 1 : vector<2x48xf32>, vector<2x208xf32> -> vector<2x256xf32>
    %cst_30 = arith.constant 0.000000e+00 : f32
    %43 = vector.shape_cast %39 : vector<1x256xi1> to vector<1x256xi1>
    %44 = vector.broadcast %43 : vector<1x256xi1> to vector<2x256xi1>
    %45 = vector.broadcast %cst_30 : f32 to vector<2x256xf32>
    %46 = arith.select %44, %42, %45 : vector<2x256xi1>, vector<2x256xf32>
    %c-2_i32 = arith.constant -2 : i32
    %47 = vector.broadcast %c-2_i32 : i32 to vector<1x256xi32>
    %48 = arith.addi %31, %47 : vector<1x256xi32>
    %c0_i32_31 = arith.constant 0 : i32
    %49 = vector.broadcast %c0_i32_31 : i32 to vector<1x256xi32>
    %50 = arith.cmpi sge, %48, %49 : vector<1x256xi32>
    %c16_i32_32 = arith.constant 16 : i32
    %51 = vector.broadcast %c16_i32_32 : i32 to vector<1x256xi32>
    %52 = arith.cmpi slt, %48, %51 : vector<1x256xi32>
    %53 = arith.andi %50, %52 : vector<1x256xi1>
    %cst_33 = arith.constant 0.000000e+00 : f32
    %54 = vector.broadcast %cst_33 : f32 to vector<2x32xf32>
    %55 = vector.extract_strided_slice %30 {offsets = [0, 0], sizes = [2, 224], strides = [1, 1]} : vector<2x256xf32> to vector<2x224xf32>
    %56 = tpu.concatenate %54, %55 in 1 : vector<2x32xf32>, vector<2x224xf32> -> vector<2x256xf32>
    %cst_34 = arith.constant 0.000000e+00 : f32
    %57 = vector.shape_cast %53 : vector<1x256xi1> to vector<1x256xi1>
    %58 = vector.broadcast %57 : vector<1x256xi1> to vector<2x256xi1>
    %59 = vector.broadcast %cst_34 : f32 to vector<2x256xf32>
    %60 = arith.select %58, %56, %59 : vector<2x256xi1>, vector<2x256xf32>
    %c-1_i32 = arith.constant -1 : i32
    %61 = vector.broadcast %c-1_i32 : i32 to vector<1x256xi32>
    %62 = arith.addi %31, %61 : vector<1x256xi32>
    %c0_i32_35 = arith.constant 0 : i32
    %63 = vector.broadcast %c0_i32_35 : i32 to vector<1x256xi32>
    %64 = arith.cmpi sge, %62, %63 : vector<1x256xi32>
    %c16_i32_36 = arith.constant 16 : i32
    %65 = vector.broadcast %c16_i32_36 : i32 to vector<1x256xi32>
    %66 = arith.cmpi slt, %62, %65 : vector<1x256xi32>
    %67 = arith.andi %64, %66 : vector<1x256xi1>
    %cst_37 = arith.constant 0.000000e+00 : f32
    %68 = vector.broadcast %cst_37 : f32 to vector<2x16xf32>
    %69 = vector.extract_strided_slice %30 {offsets = [0, 0], sizes = [2, 240], strides = [1, 1]} : vector<2x256xf32> to vector<2x240xf32>
    %70 = tpu.concatenate %68, %69 in 1 : vector<2x16xf32>, vector<2x240xf32> -> vector<2x256xf32>
    %cst_38 = arith.constant 0.000000e+00 : f32
    %71 = vector.shape_cast %67 : vector<1x256xi1> to vector<1x256xi1>
    %72 = vector.broadcast %71 : vector<1x256xi1> to vector<2x256xi1>
    %73 = vector.broadcast %cst_38 : f32 to vector<2x256xf32>
    %74 = arith.select %72, %70, %73 : vector<2x256xi1>, vector<2x256xf32>
    %c1_i32 = arith.constant 1 : i32
    %75 = vector.broadcast %c1_i32 : i32 to vector<1x256xi32>
    %76 = arith.addi %31, %75 : vector<1x256xi32>
    %c0_i32_39 = arith.constant 0 : i32
    %77 = vector.broadcast %c0_i32_39 : i32 to vector<1x256xi32>
    %78 = arith.cmpi sge, %76, %77 : vector<1x256xi32>
    %c16_i32_40 = arith.constant 16 : i32
    %79 = vector.broadcast %c16_i32_40 : i32 to vector<1x256xi32>
    %80 = arith.cmpi slt, %76, %79 : vector<1x256xi32>
    %81 = arith.andi %78, %80 : vector<1x256xi1>
    %cst_41 = arith.constant 0.000000e+00 : f32
    %82 = vector.broadcast %cst_41 : f32 to vector<2x16xf32>
    %83 = vector.extract_strided_slice %30 {offsets = [0, 16], sizes = [2, 240], strides = [1, 1]} : vector<2x256xf32> to vector<2x240xf32>
    %84 = tpu.concatenate %83, %82 in 1 : vector<2x240xf32>, vector<2x16xf32> -> vector<2x256xf32>
    %cst_42 = arith.constant 0.000000e+00 : f32
    %85 = vector.shape_cast %81 : vector<1x256xi1> to vector<1x256xi1>
    %86 = vector.broadcast %85 : vector<1x256xi1> to vector<2x256xi1>
    %87 = vector.broadcast %cst_42 : f32 to vector<2x256xf32>
    %88 = arith.select %86, %84, %87 : vector<2x256xi1>, vector<2x256xf32>
    %c2_i32 = arith.constant 2 : i32
    %89 = vector.broadcast %c2_i32 : i32 to vector<1x256xi32>
    %90 = arith.addi %31, %89 : vector<1x256xi32>
    %c0_i32_43 = arith.constant 0 : i32
    %91 = vector.broadcast %c0_i32_43 : i32 to vector<1x256xi32>
    %92 = arith.cmpi sge, %90, %91 : vector<1x256xi32>
    %c16_i32_44 = arith.constant 16 : i32
    %93 = vector.broadcast %c16_i32_44 : i32 to vector<1x256xi32>
    %94 = arith.cmpi slt, %90, %93 : vector<1x256xi32>
    %95 = arith.andi %92, %94 : vector<1x256xi1>
    %cst_45 = arith.constant 0.000000e+00 : f32
    %96 = vector.broadcast %cst_45 : f32 to vector<2x32xf32>
    %97 = vector.extract_strided_slice %30 {offsets = [0, 32], sizes = [2, 224], strides = [1, 1]} : vector<2x256xf32> to vector<2x224xf32>
    %98 = tpu.concatenate %97, %96 in 1 : vector<2x224xf32>, vector<2x32xf32> -> vector<2x256xf32>
    %cst_46 = arith.constant 0.000000e+00 : f32
    %99 = vector.shape_cast %95 : vector<1x256xi1> to vector<1x256xi1>
    %100 = vector.broadcast %99 : vector<1x256xi1> to vector<2x256xi1>
    %101 = vector.broadcast %cst_46 : f32 to vector<2x256xf32>
    %102 = arith.select %100, %98, %101 : vector<2x256xi1>, vector<2x256xf32>
    %c3_i32 = arith.constant 3 : i32
    %103 = vector.broadcast %c3_i32 : i32 to vector<1x256xi32>
    %104 = arith.addi %31, %103 : vector<1x256xi32>
    %c0_i32_47 = arith.constant 0 : i32
    %105 = vector.broadcast %c0_i32_47 : i32 to vector<1x256xi32>
    %106 = arith.cmpi sge, %104, %105 : vector<1x256xi32>
    %c16_i32_48 = arith.constant 16 : i32
    %107 = vector.broadcast %c16_i32_48 : i32 to vector<1x256xi32>
    %108 = arith.cmpi slt, %104, %107 : vector<1x256xi32>
    %109 = arith.andi %106, %108 : vector<1x256xi1>
    %cst_49 = arith.constant 0.000000e+00 : f32
    %110 = vector.broadcast %cst_49 : f32 to vector<2x48xf32>
    %111 = vector.extract_strided_slice %30 {offsets = [0, 48], sizes = [2, 208], strides = [1, 1]} : vector<2x256xf32> to vector<2x208xf32>
    %112 = tpu.concatenate %111, %110 in 1 : vector<2x208xf32>, vector<2x48xf32> -> vector<2x256xf32>
    %cst_50 = arith.constant 0.000000e+00 : f32
    %113 = vector.shape_cast %109 : vector<1x256xi1> to vector<1x256xi1>
    %114 = vector.broadcast %113 : vector<1x256xi1> to vector<2x256xi1>
    %115 = vector.broadcast %cst_50 : f32 to vector<2x256xf32>
    %116 = arith.select %114, %112, %115 : vector<2x256xi1>, vector<2x256xf32>
    %117 = tpu.concatenate %46, %60, %74, %30, %88, %102, %116 in 0 : vector<2x256xf32>, vector<2x256xf32>, vector<2x256xf32>, vector<2x256xf32>, vector<2x256xf32>, vector<2x256xf32>, vector<2x256xf32> -> vector<14x256xf32>
    %c0_51 = arith.constant 0 : index
    %c0_52 = arith.constant 0 : index
    %118 = vector.load %arg9[%c0_51, %c0_52] : memref<7x14xf32, #tpu.memory_space<vmem>>, vector<7x14xf32>
    %cst_53 = arith.constant dense<0.000000e+00> : vector<7x256xf32>
    %119 = tpu.matmul %118, %117, %cst_53 {dimension_numbers = #tpu.dot_dimension_numbers<[1], [0], [0], [1], [0, 0, 1, 1], [], []>} : vector<7x14xf32>, vector<14x256xf32>, vector<7x256xf32> -> vector<7x256xf32>
    %120 = vector.extract_strided_slice %119 {offsets = [0, 0], sizes = [1, 256], strides = [1, 1]} : vector<7x256xf32> to vector<1x256xf32>
    %c-3_i32_54 = arith.constant -3 : i32
    %121 = vector.broadcast %c-3_i32_54 : i32 to vector<1x256xi32>
    %122 = arith.addi %32, %121 : vector<1x256xi32>
    %c0_i32_55 = arith.constant 0 : i32
    %123 = vector.broadcast %c0_i32_55 : i32 to vector<1x256xi32>
    %124 = arith.cmpi sge, %122, %123 : vector<1x256xi32>
    %c16_i32_56 = arith.constant 16 : i32
    %125 = vector.broadcast %c16_i32_56 : i32 to vector<1x256xi32>
    %126 = arith.cmpi slt, %122, %125 : vector<1x256xi32>
    %127 = arith.andi %124, %126 : vector<1x256xi1>
    %cst_57 = arith.constant 0.000000e+00 : f32
    %128 = vector.broadcast %cst_57 : f32 to vector<1x3xf32>
    %129 = vector.extract_strided_slice %120 {offsets = [0, 0], sizes = [1, 253], strides = [1, 1]} : vector<1x256xf32> to vector<1x253xf32>
    %130 = tpu.concatenate %128, %129 in 1 : vector<1x3xf32>, vector<1x253xf32> -> vector<1x256xf32>
    %cst_58 = arith.constant 0.000000e+00 : f32
    %131 = vector.broadcast %cst_58 : f32 to vector<1x256xf32>
    %132 = arith.select %127, %130, %131 : vector<1x256xi1>, vector<1x256xf32>
    %133 = vector.extract_strided_slice %119 {offsets = [1, 0], sizes = [1, 256], strides = [1, 1]} : vector<7x256xf32> to vector<1x256xf32>
    %c-2_i32_59 = arith.constant -2 : i32
    %134 = vector.broadcast %c-2_i32_59 : i32 to vector<1x256xi32>
    %135 = arith.addi %32, %134 : vector<1x256xi32>
    %c0_i32_60 = arith.constant 0 : i32
    %136 = vector.broadcast %c0_i32_60 : i32 to vector<1x256xi32>
    %137 = arith.cmpi sge, %135, %136 : vector<1x256xi32>
    %c16_i32_61 = arith.constant 16 : i32
    %138 = vector.broadcast %c16_i32_61 : i32 to vector<1x256xi32>
    %139 = arith.cmpi slt, %135, %138 : vector<1x256xi32>
    %140 = arith.andi %137, %139 : vector<1x256xi1>
    %cst_62 = arith.constant 0.000000e+00 : f32
    %141 = vector.broadcast %cst_62 : f32 to vector<1x2xf32>
    %142 = vector.extract_strided_slice %133 {offsets = [0, 0], sizes = [1, 254], strides = [1, 1]} : vector<1x256xf32> to vector<1x254xf32>
    %143 = tpu.concatenate %141, %142 in 1 : vector<1x2xf32>, vector<1x254xf32> -> vector<1x256xf32>
    %cst_63 = arith.constant 0.000000e+00 : f32
    %144 = vector.broadcast %cst_63 : f32 to vector<1x256xf32>
    %145 = arith.select %140, %143, %144 : vector<1x256xi1>, vector<1x256xf32>
    %146 = arith.addf %132, %145 : vector<1x256xf32>
    %147 = vector.extract_strided_slice %119 {offsets = [2, 0], sizes = [1, 256], strides = [1, 1]} : vector<7x256xf32> to vector<1x256xf32>
    %c-1_i32_64 = arith.constant -1 : i32
    %148 = vector.broadcast %c-1_i32_64 : i32 to vector<1x256xi32>
    %149 = arith.addi %32, %148 : vector<1x256xi32>
    %c0_i32_65 = arith.constant 0 : i32
    %150 = vector.broadcast %c0_i32_65 : i32 to vector<1x256xi32>
    %151 = arith.cmpi sge, %149, %150 : vector<1x256xi32>
    %c16_i32_66 = arith.constant 16 : i32
    %152 = vector.broadcast %c16_i32_66 : i32 to vector<1x256xi32>
    %153 = arith.cmpi slt, %149, %152 : vector<1x256xi32>
    %154 = arith.andi %151, %153 : vector<1x256xi1>
    %cst_67 = arith.constant 0.000000e+00 : f32
    %155 = vector.broadcast %cst_67 : f32 to vector<1x1xf32>
    %156 = vector.extract_strided_slice %147 {offsets = [0, 0], sizes = [1, 255], strides = [1, 1]} : vector<1x256xf32> to vector<1x255xf32>
    %157 = tpu.concatenate %155, %156 in 1 : vector<1x1xf32>, vector<1x255xf32> -> vector<1x256xf32>
    %cst_68 = arith.constant 0.000000e+00 : f32
    %158 = vector.broadcast %cst_68 : f32 to vector<1x256xf32>
    %159 = arith.select %154, %157, %158 : vector<1x256xi1>, vector<1x256xf32>
    %160 = arith.addf %146, %159 : vector<1x256xf32>
    %161 = vector.extract_strided_slice %119 {offsets = [3, 0], sizes = [1, 256], strides = [1, 1]} : vector<7x256xf32> to vector<1x256xf32>
    %162 = arith.addf %160, %161 : vector<1x256xf32>
    %163 = vector.extract_strided_slice %119 {offsets = [4, 0], sizes = [1, 256], strides = [1, 1]} : vector<7x256xf32> to vector<1x256xf32>
    %c1_i32_69 = arith.constant 1 : i32
    %164 = vector.broadcast %c1_i32_69 : i32 to vector<1x256xi32>
    %165 = arith.addi %32, %164 : vector<1x256xi32>
    %c0_i32_70 = arith.constant 0 : i32
    %166 = vector.broadcast %c0_i32_70 : i32 to vector<1x256xi32>
    %167 = arith.cmpi sge, %165, %166 : vector<1x256xi32>
    %c16_i32_71 = arith.constant 16 : i32
    %168 = vector.broadcast %c16_i32_71 : i32 to vector<1x256xi32>
    %169 = arith.cmpi slt, %165, %168 : vector<1x256xi32>
    %170 = arith.andi %167, %169 : vector<1x256xi1>
    %cst_72 = arith.constant 0.000000e+00 : f32
    %171 = vector.broadcast %cst_72 : f32 to vector<1x1xf32>
    %172 = vector.extract_strided_slice %163 {offsets = [0, 1], sizes = [1, 255], strides = [1, 1]} : vector<1x256xf32> to vector<1x255xf32>
    %173 = tpu.concatenate %172, %171 in 1 : vector<1x255xf32>, vector<1x1xf32> -> vector<1x256xf32>
    %cst_73 = arith.constant 0.000000e+00 : f32
    %174 = vector.broadcast %cst_73 : f32 to vector<1x256xf32>
    %175 = arith.select %170, %173, %174 : vector<1x256xi1>, vector<1x256xf32>
    %176 = arith.addf %162, %175 : vector<1x256xf32>
    %177 = vector.extract_strided_slice %119 {offsets = [5, 0], sizes = [1, 256], strides = [1, 1]} : vector<7x256xf32> to vector<1x256xf32>
    %c2_i32_74 = arith.constant 2 : i32
    %178 = vector.broadcast %c2_i32_74 : i32 to vector<1x256xi32>
    %179 = arith.addi %32, %178 : vector<1x256xi32>
    %c0_i32_75 = arith.constant 0 : i32
    %180 = vector.broadcast %c0_i32_75 : i32 to vector<1x256xi32>
    %181 = arith.cmpi sge, %179, %180 : vector<1x256xi32>
    %c16_i32_76 = arith.constant 16 : i32
    %182 = vector.broadcast %c16_i32_76 : i32 to vector<1x256xi32>
    %183 = arith.cmpi slt, %179, %182 : vector<1x256xi32>
    %184 = arith.andi %181, %183 : vector<1x256xi1>
    %cst_77 = arith.constant 0.000000e+00 : f32
    %185 = vector.broadcast %cst_77 : f32 to vector<1x2xf32>
    %186 = vector.extract_strided_slice %177 {offsets = [0, 2], sizes = [1, 254], strides = [1, 1]} : vector<1x256xf32> to vector<1x254xf32>
    %187 = tpu.concatenate %186, %185 in 1 : vector<1x254xf32>, vector<1x2xf32> -> vector<1x256xf32>
    %cst_78 = arith.constant 0.000000e+00 : f32
    %188 = vector.broadcast %cst_78 : f32 to vector<1x256xf32>
    %189 = arith.select %184, %187, %188 : vector<1x256xi1>, vector<1x256xf32>
    %190 = arith.addf %176, %189 : vector<1x256xf32>
    %191 = vector.extract_strided_slice %119 {offsets = [6, 0], sizes = [1, 256], strides = [1, 1]} : vector<7x256xf32> to vector<1x256xf32>
    %c3_i32_79 = arith.constant 3 : i32
    %192 = vector.broadcast %c3_i32_79 : i32 to vector<1x256xi32>
    %193 = arith.addi %32, %192 : vector<1x256xi32>
    %c0_i32_80 = arith.constant 0 : i32
    %194 = vector.broadcast %c0_i32_80 : i32 to vector<1x256xi32>
    %195 = arith.cmpi sge, %193, %194 : vector<1x256xi32>
    %c16_i32_81 = arith.constant 16 : i32
    %196 = vector.broadcast %c16_i32_81 : i32 to vector<1x256xi32>
    %197 = arith.cmpi slt, %193, %196 : vector<1x256xi32>
    %198 = arith.andi %195, %197 : vector<1x256xi1>
    %cst_82 = arith.constant 0.000000e+00 : f32
    %199 = vector.broadcast %cst_82 : f32 to vector<1x3xf32>
    %200 = vector.extract_strided_slice %191 {offsets = [0, 3], sizes = [1, 253], strides = [1, 1]} : vector<1x256xf32> to vector<1x253xf32>
    %201 = tpu.concatenate %200, %199 in 1 : vector<1x253xf32>, vector<1x3xf32> -> vector<1x256xf32>
    %cst_83 = arith.constant 0.000000e+00 : f32
    %202 = vector.broadcast %cst_83 : f32 to vector<1x256xf32>
    %203 = arith.select %198, %201, %202 : vector<1x256xi1>, vector<1x256xf32>
    %204 = arith.addf %190, %203 : vector<1x256xf32>
    %cst_84 = arith.constant 0.000000e+00 : f32
    %205 = vector.broadcast %cst_84 : f32 to vector<1x256xf32>
    %206 = arith.subf %205, %204 : vector<1x256xf32>
    %207 = math.exp %206 : vector<1x256xf32>
    %cst_85 = arith.constant 1.000000e+00 : f32
    %208 = vector.broadcast %cst_85 : f32 to vector<1x256xf32>
    %209 = arith.addf %208, %207 : vector<1x256xf32>
    %cst_86 = arith.constant 1.000000e+00 : f32
    %210 = vector.broadcast %cst_86 : f32 to vector<1x256xf32>
    %211 = arith.divf %210, %209 : vector<1x256xf32>
    %212 = arith.mulf %23, %2 : vector<8x256xf32>
    %213 = vector.broadcast %211 : vector<1x256xf32> to vector<8x256xf32>
    %214 = arith.mulf %213, %2 : vector<8x256xf32>
    %215 = tpu.concatenate %2, %212, %214 in 0 : vector<8x256xf32>, vector<8x256xf32>, vector<8x256xf32> -> vector<24x256xf32>
    %c0_87 = arith.constant 0 : index
    %c0_88 = arith.constant 0 : index
    %216 = vector.load %arg3[%c0_87, %c0_88] : memref<8x24xf32, #tpu.memory_space<vmem>>, vector<8x24xf32>
    %cst_89 = arith.constant dense<0.000000e+00> : vector<8x256xf32>
    %217 = tpu.matmul %216, %215, %cst_89 {dimension_numbers = #tpu.dot_dimension_numbers<[1], [0], [0], [1], [0, 0, 1, 1], [], []>} : vector<8x24xf32>, vector<24x256xf32>, vector<8x256xf32> -> vector<8x256xf32>
    %c0_90 = arith.constant 0 : index
    %c0_91 = arith.constant 0 : index
    %218 = vector.load %arg4[%c0_90, %c0_91] : memref<8x1xf32, #tpu.memory_space<vmem>>, vector<8x1xf32>
    %219 = vector.broadcast %218 : vector<8x1xf32> to vector<8x256xf32>
    %220 = arith.addf %217, %219 : vector<8x256xf32>
    %c0_92 = arith.constant 0 : index
    %c0_93 = arith.constant 0 : index
    %221 = vector.load %arg14[%c0_92, %c0_93] : memref<8x256xf32, #tpu.memory_space<vmem>>, vector<8x256xf32>
    tpu.vector_store %arg14[%c0_92, %c0_93], %220 {strides = array<i32>} : memref<8x256xf32, #tpu.memory_space<vmem>>, vector<8x256xf32>,
    return
  }
  func.func @transform_0(%arg0: i32) -> (i32, i32) {
    %c0_i32 = arith.constant 0 : i32
    %c0_i32_0 = arith.constant 0 : i32
    return %c0_i32, %arg0 : i32, i32
  }
  func.func @transform_1(%arg0: i32) -> (i32, i32) {
    %c0_i32 = arith.constant 0 : i32
    %c0_i32_0 = arith.constant 0 : i32
    return %c0_i32, %arg0 : i32, i32
  }
  func.func @transform_2(%arg0: i32) -> (i32, i32) {
    %c0_i32 = arith.constant 0 : i32
    %c0_i32_0 = arith.constant 0 : i32
    %c0_i32_1 = arith.constant 0 : i32
    return %c0_i32, %c0_i32_0 : i32, i32
  }
  func.func @transform_3(%arg0: i32) -> (i32, i32) {
    %c0_i32 = arith.constant 0 : i32
    %c0_i32_0 = arith.constant 0 : i32
    %c0_i32_1 = arith.constant 0 : i32
    return %c0_i32, %c0_i32_0 : i32, i32
  }
  func.func @transform_4(%arg0: i32) -> (i32, i32) {
    %c0_i32 = arith.constant 0 : i32
    %c0_i32_0 = arith.constant 0 : i32
    %c0_i32_1 = arith.constant 0 : i32
    return %c0_i32, %c0_i32_0 : i32, i32
  }
  func.func @transform_5(%arg0: i32) -> (i32, i32) {
    %c0_i32 = arith.constant 0 : i32
    %c0_i32_0 = arith.constant 0 : i32
    %c0_i32_1 = arith.constant 0 : i32
    return %c0_i32, %c0_i32_0 : i32, i32
  }
  func.func @transform_6(%arg0: i32) -> (i32, i32) {
    %c0_i32 = arith.constant 0 : i32
    %c0_i32_0 = arith.constant 0 : i32
    %c0_i32_1 = arith.constant 0 : i32
    return %c0_i32, %c0_i32_0 : i32, i32
  }
  func.func @transform_7(%arg0: i32) -> (i32, i32) {
    %c0_i32 = arith.constant 0 : i32
    %c0_i32_0 = arith.constant 0 : i32
    %c0_i32_1 = arith.constant 0 : i32
    return %c0_i32, %c0_i32_0 : i32, i32
  }
  func.func @transform_8(%arg0: i32) -> (i32, i32) {
    %c0_i32 = arith.constant 0 : i32
    %c0_i32_0 = arith.constant 0 : i32
    %c0_i32_1 = arith.constant 0 : i32
    return %c0_i32, %c0_i32_0 : i32, i32
  }
  func.func @transform_9(%arg0: i32) -> (i32, i32) {
    %c0_i32 = arith.constant 0 : i32
    %c0_i32_0 = arith.constant 0 : i32
    %c0_i32_1 = arith.constant 0 : i32
    return %c0_i32, %c0_i32_0 : i32, i32
  }
  func.func @transform_10(%arg0: i32) -> (i32, i32) {
    %c0_i32 = arith.constant 0 : i32
    %c0_i32_0 = arith.constant 0 : i32
    %c0_i32_1 = arith.constant 0 : i32
    return %c0_i32, %c0_i32_0 : i32, i32
  }
  func.func @transform_11(%arg0: i32) -> (i32, i32) {
    %c0_i32 = arith.constant 0 : i32
    %c0_i32_0 = arith.constant 0 : i32
    %c0_i32_1 = arith.constant 0 : i32
    return %c0_i32, %c0_i32_0 : i32, i32
  }
  func.func @transform_12(%arg0: i32) -> (i32, i32) {
    %c0_i32 = arith.constant 0 : i32
    %c0_i32_0 = arith.constant 0 : i32
    %c0_i32_1 = arith.constant 0 : i32
    return %c0_i32, %c0_i32_0 : i32, i32
  }
  func.func @transform_13(%arg0: i32) -> (i32, i32) {
    %c0_i32 = arith.constant 0 : i32
    %c0_i32_0 = arith.constant 0 : i32
    return %c0_i32, %arg0 : i32, i32
  }
}

</mosaic_0001>

<llo_original>
// kernel: tpu_custom_call.1
$region0: #{tpu_custom_call.1}
  #allocation0 [shape = 'u32[]', space=smem, size = 0x4, offset = 0x4, fixed_abs, tag = 'smem constant byte address 0x4 - core index']
  #allocation1 [shape = 'u32[144,128]{1,0:T(1,128)}', space=vmem, size = 0x12000, scoped, tag = 'internal scratch']
  %s0 = inlined_call_operand.vmem [shape: f32[8,512], index: 0, kind: input, shape index: {}]
  %s1 = inlined_call_operand.vmem [shape: f32[8,512], index: 1, kind: input, shape index: {}]
  %s2 = inlined_call_operand.vmem [shape: f32[8,24], index: 2, kind: input, shape index: {}]
  %s3 = inlined_call_operand.vmem [shape: f32[8,1], index: 3, kind: input, shape index: {}]
  %s4 = inlined_call_operand.vmem [shape: f32[2,8], index: 4, kind: input, shape index: {}]
  %s5 = inlined_call_operand.vmem [shape: f32[2,1], index: 5, kind: input, shape index: {}]
  %s6 = inlined_call_operand.vmem [shape: f32[8,2], index: 6, kind: input, shape index: {}]
  %s7 = inlined_call_operand.vmem [shape: f32[8,1], index: 7, kind: input, shape index: {}]
  %s8 = inlined_call_operand.vmem [shape: f32[7,14], index: 8, kind: input, shape index: {}]
  %s9 = inlined_call_operand.vmem [shape: f32[256,1], index: 9, kind: input, shape index: {}]
  %s10 = inlined_call_operand.vmem [shape: f32[1,256], index: 10, kind: input, shape index: {}]
  %s11 = inlined_call_operand.vmem [shape: s32[1,256], index: 11, kind: input, shape index: {}]
  %s12 = inlined_call_operand.vmem [shape: s32[1,256], index: 12, kind: input, shape index: {}]
  %s13 = inlined_call_operand.hbm [shape: f32[8,512], index: 13, kind: output, shape index: {}]
  %s14 = sld [smem:[#allocation0]]
  $region85: #{tpu_custom_call.1} parent=0
    _
  %s16 = ssub.s32 1, %s14
  %s17 = scalar_select 0, %s16, %s14
  $region1: #{tpu_custom_call.1} parent=0
    #allocation2 [shape = 'u8[16384]{0}', space=vmem, size = 0x4000, scoped, tag = 'output window, operand 0']
    #allocation3 [shape = 's32[2]{0}', space=sflag, size = 0x8, scoped, tag = 'scoped memory for tpu_custom_call.1']
    %18 = vsyncpa [#allocation3], 0
    %s19 = scalar_lea.sflag [#allocation3], 1
    %20 = vsyncpa %s19, 0
    loop: start=0, step=1, limit=4
    $region2: #{tpu_custom_call.1} parent=1 // loop_pre_header
      _
    $region3: #{tpu_custom_call.1} parent=1 // loop_header
      %s22 = sphi 0, %s26
      %p23 = scmp.ge.s32.totalorder %s22, 4
      %s32 = sphi 0, %s34
      %s35 = sphi 0, %s32
      %s36 = sphi 0, %s35
      %s52 = sphi 0, %s36
      %s58 = sphi 0, %s60
      %s61 = sphi 0, %s58
      %s62 = sphi 0, %s61
      %s78 = sphi 0, %s62
      %s82 = sphi 0, %s82
      %s84 = sphi 0, %s82
      %s85 = sphi 0, %s84
      %s99 = sphi 0, %s85
      %s103 = sphi 0, %s103
      %s105 = sphi 0, %s103
      %s106 = sphi 0, %s105
      %s120 = sphi 0, %s106
      %s124 = sphi 0, %s124
      %s126 = sphi 0, %s124
      %s127 = sphi 0, %s126
      %s141 = sphi 0, %s127
      %s145 = sphi 0, %s145
      %s147 = sphi 0, %s145
      %s148 = sphi 0, %s147
      %s162 = sphi 0, %s148
      %s166 = sphi 0, %s166
      %s168 = sphi 0, %s166
      %s169 = sphi 0, %s168
      %s183 = sphi 0, %s169
      %s187 = sphi 0, %s187
      %s189 = sphi 0, %s187
      %s190 = sphi 0, %s189
      %s204 = sphi 0, %s190
      %s208 = sphi 0, %s208
      %s210 = sphi 0, %s208
      %s211 = sphi 0, %s210
      %s225 = sphi 0, %s211
      %s229 = sphi 0, %s229
      %s231 = sphi 0, %s229
      %s232 = sphi 0, %s231
      %s246 = sphi 0, %s232
      %s250 = sphi 0, %s250
      %s252 = sphi 0, %s250
      %s253 = sphi 0, %s252
      %s267 = sphi 0, %s253
      %s271 = sphi 0, %s271
      %s273 = sphi 0, %s271
      %s274 = sphi 0, %s273
      %s288 = sphi 0, %s274
      %s292 = sphi 0, %s292
      %s294 = sphi 0, %s292
      %s295 = sphi 0, %s294
      %s309 = sphi 0, %s295
      %s315 = sphi 0, %s317
      %s318 = sphi 0, %s315
      %s319 = sphi 0, %s318
      %s335 = sphi 0, %s319
    $region4: #{tpu_custom_call.1} parent=1 // loop_header_branch
      %25 = sbr.rel (%p23) target = $region8
    $region5: #{tpu_custom_call.1} parent=1 // loop_body
      %s27 = ssub.s32 %s22, 1
      %s28 = ssub.s32 %s22, 2
      %s29 = sadd.s32 %s22, 1
      %s30 = ssub.s32 %s22, %s29
      %p31 = scmp.eq.s32.totalorder %s30, 0
      %s33 = sadd.s32 %s32, 1
      %s34 = scalar_select %p31, %s32, %s33
      %p37 = pneg %p31
      %p38 = scmp.eq.s32.totalorder %s22, 1
      %p39 = por %p37, %p38
      %p40 = scmp.ne.s32.totalorder %s32, %s35
      %p41 = scmp.eq.s32.totalorder %s22, 0
      %p42 = por %p40, %p41
      %p43 = scmp.ne.s32.totalorder %s32, %s35
      %p44 = scmp.eq.s32.totalorder %s27, 1
      %p45 = por %p43, %p44
      %p46 = scmp.ne.s32.totalorder %s35, %s36
      %p47 = scmp.eq.s32.totalorder %s27, 0
      %p48 = por %p46, %p47
      %p49 = scmp.ne.s32.totalorder %s35, %s36
      %p50 = scmp.eq.s32.totalorder %s28, 1
      %p51 = por %p49, %p50
      %p53 = scmp.ne.s32.totalorder %s36, %s52
      %p54 = scmp.eq.s32.totalorder %s28, 0
      %p55 = por %p53, %p54
      %s56 = ssub.s32 %s22, %s29
      %p57 = scmp.eq.s32.totalorder %s56, 0
      %s59 = sadd.s32 %s58, 1
      %s60 = scalar_select %p57, %s58, %s59
      %p63 = pneg %p57
      %p64 = scmp.eq.s32.totalorder %s22, 1
      %p65 = por %p63, %p64
      %p66 = scmp.ne.s32.totalorder %s58, %s61
      %p67 = scmp.eq.s32.totalorder %s22, 0
      %p68 = por %p66, %p67
      %p69 = scmp.ne.s32.totalorder %s58, %s61
      %p70 = scmp.eq.s32.totalorder %s27, 1
      %p71 = por %p69, %p70
      %p72 = scmp.ne.s32.totalorder %s61, %s62
      %p73 = scmp.eq.s32.totalorder %s27, 0
      %p74 = por %p72, %p73
      %p75 = scmp.ne.s32.totalorder %s61, %s62
      %p76 = scmp.eq.s32.totalorder %s28, 1
      %p77 = por %p75, %p76
      %p79 = scmp.ne.s32.totalorder %s62, %s78
      %p80 = scmp.eq.s32.totalorder %s28, 0
      %p81 = por %p79, %p80
      %s83 = sadd.s32 %s82, 1
      %p86 = scmp.eq.s32.totalorder %s22, 1
      %p87 = scmp.ne.s32.totalorder %s82, %s84
      %p88 = scmp.eq.s32.totalorder %s22, 0
      %p89 = por %p87, %p88
      %p90 = scmp.ne.s32.totalorder %s82, %s84
      %p91 = scmp.eq.s32.totalorder %s27, 1
      %p92 = por %p90, %p91
      %p93 = scmp.ne.s32.totalorder %s84, %s85
      %p94 = scmp.eq.s32.totalorder %s27, 0
      %p95 = por %p93, %p94
      %p96 = scmp.ne.s32.totalorder %s84, %s85
      %p97 = scmp.eq.s32.totalorder %s28, 1
      %p98 = por %p96, %p97
      %p100 = scmp.ne.s32.totalorder %s85, %s99
      %p101 = scmp.eq.s32.totalorder %s28, 0
      %p102 = por %p100, %p101
      %s104 = sadd.s32 %s103, 1
      %p107 = scmp.eq.s32.totalorder %s22, 1
      %p108 = scmp.ne.s32.totalorder %s103, %s105
      %p109 = scmp.eq.s32.totalorder %s22, 0
      %p110 = por %p108, %p109
      %p111 = scmp.ne.s32.totalorder %s103, %s105
      %p112 = scmp.eq.s32.totalorder %s27, 1
      %p113 = por %p111, %p112
      %p114 = scmp.ne.s32.totalorder %s105, %s106
      %p115 = scmp.eq.s32.totalorder %s27, 0
      %p116 = por %p114, %p115
      %p117 = scmp.ne.s32.totalorder %s105, %s106
      %p118 = scmp.eq.s32.totalorder %s28, 1
      %p119 = por %p117, %p118
      %p121 = scmp.ne.s32.totalorder %s106, %s120
      %p122 = scmp.eq.s32.totalorder %s28, 0
      %p123 = por %p121, %p122
      %s125 = sadd.s32 %s124, 1
      %p128 = scmp.eq.s32.totalorder %s22, 1
      %p129 = scmp.ne.s32.totalorder %s124, %s126
      %p130 = scmp.eq.s32.totalorder %s22, 0
      %p131 = por %p129, %p130
      %p132 = scmp.ne.s32.totalorder %s124, %s126
      %p133 = scmp.eq.s32.totalorder %s27, 1
      %p134 = por %p132, %p133
      %p135 = scmp.ne.s32.totalorder %s126, %s127
      %p136 = scmp.eq.s32.totalorder %s27, 0
      %p137 = por %p135, %p136
      %p138 = scmp.ne.s32.totalorder %s126, %s127
      %p139 = scmp.eq.s32.totalorder %s28, 1
      %p140 = por %p138, %p139
      %p142 = scmp.ne.s32.totalorder %s127, %s141
      %p143 = scmp.eq.s32.totalorder %s28, 0
      %p144 = por %p142, %p143
      %s146 = sadd.s32 %s145, 1
      %p149 = scmp.eq.s32.totalorder %s22, 1
      %p150 = scmp.ne.s32.totalorder %s145, %s147
      %p151 = scmp.eq.s32.totalorder %s22, 0
      %p152 = por %p150, %p151
      %p153 = scmp.ne.s32.totalorder %s145, %s147
      %p154 = scmp.eq.s32.totalorder %s27, 1
      %p155 = por %p153, %p154
      %p156 = scmp.ne.s32.totalorder %s147, %s148
      %p157 = scmp.eq.s32.totalorder %s27, 0
      %p158 = por %p156, %p157
      %p159 = scmp.ne.s32.totalorder %s147, %s148
      %p160 = scmp.eq.s32.totalorder %s28, 1
      %p161 = por %p159, %p160
      %p163 = scmp.ne.s32.totalorder %s148, %s162
      %p164 = scmp.eq.s32.totalorder %s28, 0
      %p165 = por %p163, %p164
      %s167 = sadd.s32 %s166, 1
      %p170 = scmp.eq.s32.totalorder %s22, 1
      %p171 = scmp.ne.s32.totalorder %s166, %s168
      %p172 = scmp.eq.s32.totalorder %s22, 0
      %p173 = por %p171, %p172
      %p174 = scmp.ne.s32.totalorder %s166, %s168
      %p175 = scmp.eq.s32.totalorder %s27, 1
      %p176 = por %p174, %p175
      %p177 = scmp.ne.s32.totalorder %s168, %s169
      %p178 = scmp.eq.s32.totalorder %s27, 0
      %p179 = por %p177, %p178
      %p180 = scmp.ne.s32.totalorder %s168, %s169
      %p181 = scmp.eq.s32.totalorder %s28, 1
      %p182 = por %p180, %p181
      %p184 = scmp.ne.s32.totalorder %s169, %s183
      %p185 = scmp.eq.s32.totalorder %s28, 0
      %p186 = por %p184, %p185
      %s188 = sadd.s32 %s187, 1
      %p191 = scmp.eq.s32.totalorder %s22, 1
      %p192 = scmp.ne.s32.totalorder %s187, %s189
      %p193 = scmp.eq.s32.totalorder %s22, 0
      %p194 = por %p192, %p193
      %p195 = scmp.ne.s32.totalorder %s187, %s189
      %p196 = scmp.eq.s32.totalorder %s27, 1
      %p197 = por %p195, %p196
      %p198 = scmp.ne.s32.totalorder %s189, %s190
      %p199 = scmp.eq.s32.totalorder %s27, 0
      %p200 = por %p198, %p199
      %p201 = scmp.ne.s32.totalorder %s189, %s190
      %p202 = scmp.eq.s32.totalorder %s28, 1
      %p203 = por %p201, %p202
      %p205 = scmp.ne.s32.totalorder %s190, %s204
      %p206 = scmp.eq.s32.totalorder %s28, 0
      %p207 = por %p205, %p206
      %s209 = sadd.s32 %s208, 1
      %p212 = scmp.eq.s32.totalorder %s22, 1
      %p213 = scmp.ne.s32.totalorder %s208, %s210
      %p214 = scmp.eq.s32.totalorder %s22, 0
      %p215 = por %p213, %p214
      %p216 = scmp.ne.s32.totalorder %s208, %s210
      %p217 = scmp.eq.s32.totalorder %s27, 1
      %p218 = por %p216, %p217
      %p219 = scmp.ne.s32.totalorder %s210, %s211
      %p220 = scmp.eq.s32.totalorder %s27, 0
      %p221 = por %p219, %p220
      %p222 = scmp.ne.s32.totalorder %s210, %s211
      %p223 = scmp.eq.s32.totalorder %s28, 1
      %p224 = por %p222, %p223
      %p226 = scmp.ne.s32.totalorder %s211, %s225
      %p227 = scmp.eq.s32.totalorder %s28, 0
      %p228 = por %p226, %p227
      %s230 = sadd.s32 %s229, 1
      %p233 = scmp.eq.s32.totalorder %s22, 1
      %p234 = scmp.ne.s32.totalorder %s229, %s231
      %p235 = scmp.eq.s32.totalorder %s22, 0
      %p236 = por %p234, %p235
      %p237 = scmp.ne.s32.totalorder %s229, %s231
      %p238 = scmp.eq.s32.totalorder %s27, 1
      %p239 = por %p237, %p238
      %p240 = scmp.ne.s32.totalorder %s231, %s232
      %p241 = scmp.eq.s32.totalorder %s27, 0
      %p242 = por %p240, %p241
      %p243 = scmp.ne.s32.totalorder %s231, %s232
      %p244 = scmp.eq.s32.totalorder %s28, 1
      %p245 = por %p243, %p244
      %p247 = scmp.ne.s32.totalorder %s232, %s246
      %p248 = scmp.eq.s32.totalorder %s28, 0
      %p249 = por %p247, %p248
      %s251 = sadd.s32 %s250, 1
      %p254 = scmp.eq.s32.totalorder %s22, 1
      %p255 = scmp.ne.s32.totalorder %s250, %s252
      %p256 = scmp.eq.s32.totalorder %s22, 0
      %p257 = por %p255, %p256
      %p258 = scmp.ne.s32.totalorder %s250, %s252
      %p259 = scmp.eq.s32.totalorder %s27, 1
      %p260 = por %p258, %p259
      %p261 = scmp.ne.s32.totalorder %s252, %s253
      %p262 = scmp.eq.s32.totalorder %s27, 0
      %p263 = por %p261, %p262
      %p264 = scmp.ne.s32.totalorder %s252, %s253
      %p265 = scmp.eq.s32.totalorder %s28, 1
      %p266 = por %p264, %p265
      %p268 = scmp.ne.s32.totalorder %s253, %s267
      %p269 = scmp.eq.s32.totalorder %s28, 0
      %p270 = por %p268, %p269
      %s272 = sadd.s32 %s271, 1
      %p275 = scmp.eq.s32.totalorder %s22, 1
      %p276 = scmp.ne.s32.totalorder %s271, %s273
      %p277 = scmp.eq.s32.totalorder %s22, 0
      %p278 = por %p276, %p277
      %p279 = scmp.ne.s32.totalorder %s271, %s273
      %p280 = scmp.eq.s32.totalorder %s27, 1
      %p281 = por %p279, %p280
      %p282 = scmp.ne.s32.totalorder %s273, %s274
      %p283 = scmp.eq.s32.totalorder %s27, 0
      %p284 = por %p282, %p283
      %p285 = scmp.ne.s32.totalorder %s273, %s274
      %p286 = scmp.eq.s32.totalorder %s28, 1
      %p287 = por %p285, %p286
      %p289 = scmp.ne.s32.totalorder %s274, %s288
      %p290 = scmp.eq.s32.totalorder %s28, 0
      %p291 = por %p289, %p290
      %s293 = sadd.s32 %s292, 1
      %p296 = scmp.eq.s32.totalorder %s22, 1
      %p297 = scmp.ne.s32.totalorder %s292, %s294
      %p298 = scmp.eq.s32.totalorder %s22, 0
      %p299 = por %p297, %p298
      %p300 = scmp.ne.s32.totalorder %s292, %s294
      %p301 = scmp.eq.s32.totalorder %s27, 1
      %p302 = por %p300, %p301
      %p303 = scmp.ne.s32.totalorder %s294, %s295
      %p304 = scmp.eq.s32.totalorder %s27, 0
      %p305 = por %p303, %p304
      %p306 = scmp.ne.s32.totalorder %s294, %s295
      %p307 = scmp.eq.s32.totalorder %s28, 1
      %p308 = por %p306, %p307
      %p310 = scmp.ne.s32.totalorder %s295, %s309
      %p311 = scmp.eq.s32.totalorder %s28, 0
      %p312 = por %p310, %p311
      %s313 = ssub.s32 %s22, %s29
      %p314 = scmp.eq.s32.totalorder %s313, 0
      %s316 = sadd.s32 %s315, 1
      %s317 = scalar_select %p314, %s315, %s316
      %p320 = pneg %p314
      %p321 = scmp.eq.s32.totalorder %s22, 1
      %p322 = por %p320, %p321
      %p323 = scmp.ne.s32.totalorder %s315, %s318
      %p324 = scmp.eq.s32.totalorder %s22, 0
      %p325 = por %p323, %p324
      %p326 = scmp.ne.s32.totalorder %s315, %s318
      %p327 = scmp.eq.s32.totalorder %s27, 1
      %p328 = por %p326, %p327
      %p329 = scmp.ne.s32.totalorder %s318, %s319
      %p330 = scmp.eq.s32.totalorder %s27, 0
      %p331 = por %p329, %p330
      %p332 = scmp.ne.s32.totalorder %s318, %s319
      %p333 = scmp.eq.s32.totalorder %s28, 1
      %p334 = por %p332, %p333
      %p336 = scmp.ne.s32.totalorder %s319, %s335
      %p337 = scmp.eq.s32.totalorder %s28, 0
      %p338 = por %p336, %p337
      %p339 = scmp.le.s32.totalorder 1, %s22
      %p340 = scmp.lt.s32.totalorder %s22, 3
      %p341 = pnand %p339, %p340
      %p342 = pneg %p341
      // Predicated region
      $region9: #{tpu_custom_call.1} parent=5 // pred_check
        _
      $region10: #{tpu_custom_call.1} parent=5 // pred_check_branch
        %344 = sbr.rel (%p341) target = $region12
      $region11: #{tpu_custom_call.1} parent=5 // pred_region
        %s345 = ssub.s32 %s22, 1
        // Predicated region
        $region13: #{tpu_custom_call.1} parent=11 // pred_check
          %p346 = pneg %p95
        $region14: #{tpu_custom_call.1} parent=11 // pred_check_branch
          %348 = sbr.rel (%p346) target = $region16
        $region15: #{tpu_custom_call.1} parent=11 // pred_region
          _
        $region16: #{tpu_custom_call.1} parent=11 // pred_fallthru
          _
        // Predicated region
        $region17: #{tpu_custom_call.1} parent=11 // pred_check
          %p349 = pneg %p116
        $region18: #{tpu_custom_call.1} parent=11 // pred_check_branch
          %351 = sbr.rel (%p349) target = $region20
        $region19: #{tpu_custom_call.1} parent=11 // pred_region
          _
        $region20: #{tpu_custom_call.1} parent=11 // pred_fallthru
          _
        // Predicated region
        $region21: #{tpu_custom_call.1} parent=11 // pred_check
          %p352 = pneg %p137
        $region22: #{tpu_custom_call.1} parent=11 // pred_check_branch
          %354 = sbr.rel (%p352) target = $region24
        $region23: #{tpu_custom_call.1} parent=11 // pred_region
          _
        $region24: #{tpu_custom_call.1} parent=11 // pred_fallthru
          _
        // Predicated region
        $region25: #{tpu_custom_call.1} parent=11 // pred_check
          %p355 = pneg %p158
        $region26: #{tpu_custom_call.1} parent=11 // pred_check_branch
          %357 = sbr.rel (%p355) target = $region28
        $region27: #{tpu_custom_call.1} parent=11 // pred_region
          _
        $region28: #{tpu_custom_call.1} parent=11 // pred_fallthru
          _
        // Predicated region
        $region29: #{tpu_custom_call.1} parent=11 // pred_check
          %p358 = pneg %p179
        $region30: #{tpu_custom_call.1} parent=11 // pred_check_branch
          %360 = sbr.rel (%p358) target = $region32
        $region31: #{tpu_custom_call.1} parent=11 // pred_region
          _
        $region32: #{tpu_custom_call.1} parent=11 // pred_fallthru
          _
        // Predicated region
        $region33: #{tpu_custom_call.1} parent=11 // pred_check
          %p361 = pneg %p200
        $region34: #{tpu_custom_call.1} parent=11 // pred_check_branch
          %363 = sbr.rel (%p361) target = $region36
        $region35: #{tpu_custom_call.1} parent=11 // pred_region
          _
        $region36: #{tpu_custom_call.1} parent=11 // pred_fallthru
          _
        // Predicated region
        $region37: #{tpu_custom_call.1} parent=11 // pred_check
          %p364 = pneg %p221
        $region38: #{tpu_custom_call.1} parent=11 // pred_check_branch
          %366 = sbr.rel (%p364) target = $region40
        $region39: #{tpu_custom_call.1} parent=11 // pred_region
          _
        $region40: #{tpu_custom_call.1} parent=11 // pred_fallthru
          _
        // Predicated region
        $region41: #{tpu_custom_call.1} parent=11 // pred_check
          %p367 = pneg %p242
        $region42: #{tpu_custom_call.1} parent=11 // pred_check_branch
          %369 = sbr.rel (%p367) target = $region44
        $region43: #{tpu_custom_call.1} parent=11 // pred_region
          _
        $region44: #{tpu_custom_call.1} parent=11 // pred_fallthru
          _
        // Predicated region
        $region45: #{tpu_custom_call.1} parent=11 // pred_check
          %p370 = pneg %p263
        $region46: #{tpu_custom_call.1} parent=11 // pred_check_branch
          %372 = sbr.rel (%p370) target = $region48
        $region47: #{tpu_custom_call.1} parent=11 // pred_region
          _
        $region48: #{tpu_custom_call.1} parent=11 // pred_fallthru
          _
        // Predicated region
        $region49: #{tpu_custom_call.1} parent=11 // pred_check
          %p373 = pneg %p284
        $region50: #{tpu_custom_call.1} parent=11 // pred_check_branch
          %375 = sbr.rel (%p373) target = $region52
        $region51: #{tpu_custom_call.1} parent=11 // pred_region
          _
        $region52: #{tpu_custom_call.1} parent=11 // pred_fallthru
          _
        // Predicated region
        $region53: #{tpu_custom_call.1} parent=11 // pred_check
          %p376 = pneg %p305
        $region54: #{tpu_custom_call.1} parent=11 // pred_check_branch
          %378 = sbr.rel (%p376) target = $region56
        $region55: #{tpu_custom_call.1} parent=11 // pred_region
          _
        $region56: #{tpu_custom_call.1} parent=11 // pred_fallthru
          _
      $region12: #{tpu_custom_call.1} parent=5 // pred_fallthru
        _
      %p379 = scmp.lt.s32.totalorder %s22, 2
      // Predicated region
      $region57: #{tpu_custom_call.1} parent=5 // pred_check
        %p380 = pneg %p379
      $region58: #{tpu_custom_call.1} parent=5 // pred_check_branch
        %382 = sbr.rel (%p380) target = $region60
      $region59: #{tpu_custom_call.1} parent=5 // pred_region
        // Predicated region
        $region61: #{tpu_custom_call.1} parent=59 // pred_check
          %p383 = pneg %p42
        $region62: #{tpu_custom_call.1} parent=59 // pred_check_branch
          %385 = sbr.rel (%p383) target = $region64
        $region63: #{tpu_custom_call.1} parent=59 // pred_region
          %s386 = smul.u32 2, %s22
          %p387 = scmp.lt.s32.totalorder %s386, 3
          %s388 = scalar_select %p387, %s386, 3
          %s389 = smul.addr %s388, 8
          %s390 = scalar_lea.vmem %s0, %s389
          %s391 = smul.u32 2, %s22
        $region64: #{tpu_custom_call.1} parent=59 // pred_fallthru
          _
        // Predicated region
        $region65: #{tpu_custom_call.1} parent=59 // pred_check
          %p392 = pneg %p68
        $region66: #{tpu_custom_call.1} parent=59 // pred_check_branch
          %394 = sbr.rel (%p392) target = $region68
        $region67: #{tpu_custom_call.1} parent=59 // pred_region
          %s395 = smul.u32 2, %s22
          %p396 = scmp.lt.s32.totalorder %s395, 3
          %s397 = scalar_select %p396, %s395, 3
          %s398 = smul.addr %s397, 8
          %s399 = scalar_lea.vmem %s1, %s398
          %s400 = smul.u32 2, %s22
        $region68: #{tpu_custom_call.1} parent=59 // pred_fallthru
          _
      $region60: #{tpu_custom_call.1} parent=5 // pred_fallthru
        _
      %p401 = scmp.le.s32.totalorder 1, %s22
      %p402 = scmp.lt.s32.totalorder %s22, 3
      %p403 = pnand %p401, %p402
      %p404 = pneg %p403
      // Predicated region
      $region69: #{tpu_custom_call.1} parent=5 // pred_check
        _
      $region70: #{tpu_custom_call.1} parent=5 // pred_check_branch
        %406 = sbr.rel (%p403) target = $region72
      $region71: #{tpu_custom_call.1} parent=5 // pred_region
        %s407 = ssub.s32 %s22, 1
        %s408 = smul.u32 2, %s27
        %p409 = scmp.lt.s32.totalorder %s408, 3
        %s410 = scalar_select %p409, %s408, 3
        %s411 = smul.addr %s410, 8
        %s412 = scalar_lea.vmem %s0, %s411
        %p413 = pneg %p48
        %p414 = pneg %p45
        %s415 = smul.u32 2, %s27
        %p416 = scmp.lt.s32.totalorder %s415, 3
        %s417 = scalar_select %p416, %s415, 3
        %s418 = smul.addr %s417, 8
        %s419 = scalar_lea.vmem %s1, %s418
        %p420 = pneg %p74
        %p421 = pneg %p71
        %p422 = pneg %p95
        %p423 = pneg %p92
        %p424 = pneg %p116
        %p425 = pneg %p113
        %p426 = pneg %p137
        %p427 = pneg %p134
        %p428 = pneg %p158
        %p429 = pneg %p155
        %p430 = pneg %p179
        %p431 = pneg %p176
        %p432 = pneg %p200
        %p433 = pneg %p197
        %p434 = pneg %p221
        %p435 = pneg %p218
        %p436 = pneg %p242
        %p437 = pneg %p239
        %p438 = pneg %p263
        %p439 = pneg %p260
        %p440 = pneg %p284
        %p441 = pneg %p281
        %p442 = pneg %p305
        %p443 = pneg %p302
        %p444 = pneg %p331
        %p445 = pneg %p328
        %s446 = sand.u32 %s318, 1
        %s447 = scalar_lea.sflag [#allocation3], %s446
        %s448 = sand.u32 %s318, 1
        %s449 = smul.addr %s448, 16
        %s450 = scalar_lea.vmem [#allocation2], %s449
        %s451 = smul.u32 2, %s27
        %p452 = scmp.lt.s32.totalorder %s451, 3
        %s453 = scalar_select %p452, %s451, 3
        %s454 = smul.addr %s453, 8
        %s455 = scalar_lea.vmem %s0, %s454
        %s456 = smul.u32 2, %s27
        %s457 = smul.u32 2, %s27
        %p458 = scmp.lt.s32.totalorder %s457, 3
        %s459 = scalar_select %p458, %s457, 3
        %s460 = smul.addr %s459, 8
        %s461 = scalar_lea.vmem %s1, %s460
        %s462 = smul.u32 2, %s27
        %s463 = smul.u32 2, %s27
        %v464 = vld [vmem:[%s455] sm:$0xff]
        %v465 = vld [vmem:[%s455 + $0x8] sm:$0xff]
        %v466 = vld [vmem:[%s461] sm:$0xff]
        %v467 = vld [vmem:[%s461 + $0x8] sm:$0xff]
        %v468 = vmul.f32 %v464, %v466
        %v469 = vmul.f32 %v465, %v467
        %v470 = vld [vmem:[%s9] sm:$0xff]
        %v471 = vld [vmem:[%s9 + $0x8] sm:$0xff]
        %v472 = vld [vmem:[%s9 + $0x10] sm:$0xff]
        %v473 = vld [vmem:[%s9 + $0x18] sm:$0xff]
        %v474 = vld [vmem:[%s9 + $0x20] sm:$0xff]
        %v475 = vld [vmem:[%s9 + $0x28] sm:$0xff]
        %v476 = vld [vmem:[%s9 + $0x30] sm:$0xff]
        %v477 = vld [vmem:[%s9 + $0x38] sm:$0xff]
        %v478 = vld [vmem:[%s9 + $0x40] sm:$0xff]
        %v479 = vld [vmem:[%s9 + $0x48] sm:$0xff]
        %v480 = vld [vmem:[%s9 + $0x50] sm:$0xff]
        %v481 = vld [vmem:[%s9 + $0x58] sm:$0xff]
        %v482 = vld [vmem:[%s9 + $0x60] sm:$0xff]
        %v483 = vld [vmem:[%s9 + $0x68] sm:$0xff]
        %v484 = vld [vmem:[%s9 + $0x70] sm:$0xff]
        %v485 = vld [vmem:[%s9 + $0x78] sm:$0xff]
        %v486 = vld [vmem:[%s9 + $0x80] sm:$0xff]
        %v487 = vld [vmem:[%s9 + $0x88] sm:$0xff]
        %v488 = vld [vmem:[%s9 + $0x90] sm:$0xff]
        %v489 = vld [vmem:[%s9 + $0x98] sm:$0xff]
        %v490 = vld [vmem:[%s9 + $0xa0] sm:$0xff]
        %v491 = vld [vmem:[%s9 + $0xa8] sm:$0xff]
        %v492 = vld [vmem:[%s9 + $0xb0] sm:$0xff]
        %v493 = vld [vmem:[%s9 + $0xb8] sm:$0xff]
        %v494 = vld [vmem:[%s9 + $0xc0] sm:$0xff]
        %v495 = vld [vmem:[%s9 + $0xc8] sm:$0xff]
        %v496 = vld [vmem:[%s9 + $0xd0] sm:$0xff]
        %v497 = vld [vmem:[%s9 + $0xd8] sm:$0xff]
        %v498 = vld [vmem:[%s9 + $0xe0] sm:$0xff]
        %v499 = vld [vmem:[%s9 + $0xe8] sm:$0xff]
        %v500 = vld [vmem:[%s9 + $0xf0] sm:$0xff]
        %v501 = vld [vmem:[%s9 + $0xf8] sm:$0xff]
        %502 = vmatprep.subr.mxu0 0.0
        %503 = vmatpush1.msra.mxu0 %v470
        %504 = vmatprep.subr.mxu0 0.0
        %505 = vmatpush1.msra.mxu0 %v471
        %506 = vmatprep.subr.mxu0 0.0
        %507 = vmatpush1.msra.mxu0 %v472
        %508 = vmatprep.subr.mxu0 0.0
        %509 = vmatpush1.msra.mxu0 %v473
        %510 = vmatprep.subr.mxu0 0.0
        %511 = vmatpush1.msra.mxu0 %v474
        %512 = vmatprep.subr.mxu0 0.0
        %513 = vmatpush1.msra.mxu0 %v475
        %514 = vmatprep.subr.mxu0 0.0
        %515 = vmatpush1.msra.mxu0 %v476
        %516 = vmatprep.subr.mxu0 0.0
        %517 = vmatpush1.msra.mxu0 %v477
        %518 = vmatprep.subr.mxu0 0.0
        %519 = vmatpush1.msra.mxu0 %v478
        %520 = vmatprep.subr.mxu0 0.0
        %521 = vmatpush1.msra.mxu0 %v479
        %522 = vmatprep.subr.mxu0 0.0
        %523 = vmatpush1.msra.mxu0 %v480
        %524 = vmatprep.subr.mxu0 0.0
        %525 = vmatpush1.msra.mxu0 %v481
        %526 = vmatprep.subr.mxu0 0.0
        %527 = vmatpush1.msra.mxu0 %v482
        %528 = vmatprep.subr.mxu0 0.0
        %529 = vmatpush1.msra.mxu0 %v483
        %530 = vmatprep.subr.mxu0 0.0
        %531 = vmatpush1.msra.mxu0 %v484
        %532 = vmatprep.subr.mxu0 0.0
        %533 = vmatpush1.msra.mxu0 %v485
        %534 = vmatprep.subr.mxu0 0.0
        %535 = vmatpush1.msra.mxu0 %v486
        %536 = vmatprep.subr.mxu0 0.0
        %537 = vmatpush1.msra.mxu0 %v487
        %538 = vmatprep.subr.mxu0 0.0
        %539 = vmatpush1.msra.mxu0 %v488
        %540 = vmatprep.subr.mxu0 0.0
        %541 = vmatpush1.msra.mxu0 %v489
        %542 = vmatprep.subr.mxu0 0.0
        %543 = vmatpush1.msra.mxu0 %v490
        %544 = vmatprep.subr.mxu0 0.0
        %545 = vmatpush1.msra.mxu0 %v491
        %546 = vmatprep.subr.mxu0 0.0
        %547 = vmatpush1.msra.mxu0 %v492
        %548 = vmatprep.subr.mxu0 0.0
        %549 = vmatpush1.msra.mxu0 %v493
        %550 = vmatprep.subr.mxu0 0.0
        %551 = vmatpush1.msra.mxu0 %v494
        %552 = vmatprep.subr.mxu0 0.0
        %553 = vmatpush1.msra.mxu0 %v495
        %554 = vmatprep.subr.mxu0 0.0
        %555 = vmatpush1.msra.mxu0 %v496
        %556 = vmatprep.subr.mxu0 0.0
        %557 = vmatpush1.msra.mxu0 %v497
        %558 = vmatprep.subr.mxu0 0.0
        %559 = vmatpush1.msra.mxu0 %v498
        %560 = vmatprep.subr.mxu0 0.0
        %561 = vmatpush1.msra.mxu0 %v499
        %562 = vmatprep.subr.mxu0 0.0
        %563 = vmatpush1.msra.mxu0 %v500
        %564 = vmatprep.subr.mxu0 0.0
        %565 = vmatpush1.msra.mxu0 %v501
        %566 = vmatprep.mubr.f32.mxu0 %v469
        %567 = vmatmul.mubr.f32.gmra.mrb[0].mxu0 %v468
        %v568 = vpop.f32.mrb[0].mxu0
        %v569 = vadd.f32 0.0, %v568
        %v570 = vpop.f32.mrb[0].mxu0
        %571 = vdwg.mxu0
        %v572 = vld [vmem:[%s4] sm:$0x3]
        %v573 = vld [vmem:[%s5] sm:$0x3]
        %vm574 = vcmask 64512
        %v576 = vsel %vm574, %v572, 0
        %578 = vmatprep.subr.mxu0 0.0
        %579 = vmatpush1.msra.mxu0 %v569
        %580 = vmatprep.subr.mxu0 0.0
        %581 = vmatpush1.msra.mxu0 0.0
        %582 = vmatprep.subr.mxu0 0.0
        %583 = vmatpush1.msra.mxu0 0.0
        %584 = vmatprep.subr.mxu0 0.0
        %585 = vmatpush1.msra.mxu0 0.0
        %586 = vmatprep.subr.mxu0 0.0
        %587 = vmatpush1.msra.mxu0 0.0
        %588 = vmatprep.subr.mxu0 0.0
        %589 = vmatpush1.msra.mxu0 0.0
        %590 = vmatprep.subr.mxu0 0.0
        %591 = vmatpush1.msra.mxu0 0.0
        %592 = vmatprep.subr.mxu0 0.0
        %593 = vmatpush1.msra.mxu0 0.0
        %594 = vmatprep.subr.mxu0 0.0
        %595 = vmatpush1.msra.mxu0 0.0
        %596 = vmatprep.subr.mxu0 0.0
        %597 = vmatpush1.msra.mxu0 0.0
        %598 = vmatprep.subr.mxu0 0.0
        %599 = vmatpush1.msra.mxu0 0.0
        %600 = vmatprep.subr.mxu0 0.0
        %601 = vmatpush1.msra.mxu0 0.0
        %602 = vmatprep.subr.mxu0 0.0
        %603 = vmatpush1.msra.mxu0 0.0
        %604 = vmatprep.subr.mxu0 0.0
        %605 = vmatpush1.msra.mxu0 0.0
        %606 = vmatprep.subr.mxu0 0.0
        %607 = vmatpush1.msra.mxu0 0.0
        %608 = vmatprep.subr.mxu0 0.0
        %609 = vmatpush1.msra.mxu0 0.0
        %610 = vmatprep.subr.mxu0 0.0
        %611 = vmatpush1.msra.mxu0 0.0
        %612 = vmatprep.subr.mxu0 0.0
        %613 = vmatpush1.msra.mxu0 0.0
        %614 = vmatprep.subr.mxu0 0.0
        %615 = vmatpush1.msra.mxu0 0.0
        %616 = vmatprep.subr.mxu0 0.0
        %617 = vmatpush1.msra.mxu0 0.0
        %618 = vmatprep.subr.mxu0 0.0
        %619 = vmatpush1.msra.mxu0 0.0
        %620 = vmatprep.subr.mxu0 0.0
        %621 = vmatpush1.msra.mxu0 0.0
        %622 = vmatprep.subr.mxu0 0.0
        %623 = vmatpush1.msra.mxu0 0.0
        %624 = vmatprep.subr.mxu0 0.0
        %625 = vmatpush1.msra.mxu0 0.0
        %626 = vmatprep.subr.mxu0 0.0
        %627 = vmatpush1.msra.mxu0 0.0
        %628 = vmatprep.subr.mxu0 0.0
        %629 = vmatpush1.msra.mxu0 0.0
        %630 = vmatprep.subr.mxu0 0.0
        %631 = vmatpush1.msra.mxu0 0.0
        %632 = vmatprep.subr.mxu0 0.0
        %633 = vmatpush1.msra.mxu0 0.0
        %634 = vmatprep.subr.mxu0 0.0
        %635 = vmatpush1.msra.mxu0 0.0
        %636 = vmatprep.subr.mxu0 0.0
        %637 = vmatpush1.msra.mxu0 0.0
        %638 = vmatprep.subr.mxu0 0.0
        %639 = vmatpush1.msra.mxu0 0.0
        %640 = vmatprep.subr.mxu0 0.0
        %641 = vmatpush1.msra.mxu0 0.0
        %642 = vmatprep.mubr.f32.mxu0 0.0
        %643 = vmatmul.mubr.f32.gmra.mrb[0].mxu0 %v576
        %v644 = vpop.f32.mrb[0].mxu0
        %v645 = vadd.f32 %v573, %v644
        %v646 = vpop.f32.mrb[0].mxu0
        %647 = vdwg.mxu0
        %v648 = vmax.f32 %v645, 0.0
        %v649 = vld [vmem:[%s6] sm:$0xff]
        %v650 = vld [vmem:[%s7] sm:$0xff]
        %vm651 = vcmask 15360
        %v653 = vsel %vm651, %v649, 0
        %vm655 = vcmask 1041408
        %v657 = vsel %vm655, %v648, 0
        %659 = vmatprep.subr.mxu0 0.0
        %660 = vmatpush1.msra.mxu0 %v657
        %661 = vmatprep.subr.mxu0 0.0
        %662 = vmatpush1.msra.mxu0 0.0
        %663 = vmatprep.subr.mxu0 0.0
        %664 = vmatpush1.msra.mxu0 0.0
        %665 = vmatprep.subr.mxu0 0.0
        %666 = vmatpush1.msra.mxu0 0.0
        %667 = vmatprep.subr.mxu0 0.0
        %668 = vmatpush1.msra.mxu0 0.0
        %669 = vmatprep.subr.mxu0 0.0
        %670 = vmatpush1.msra.mxu0 0.0
        %671 = vmatprep.subr.mxu0 0.0
        %672 = vmatpush1.msra.mxu0 0.0
        %673 = vmatprep.subr.mxu0 0.0
        %674 = vmatpush1.msra.mxu0 0.0
        %675 = vmatprep.subr.mxu0 0.0
        %676 = vmatpush1.msra.mxu0 0.0
        %677 = vmatprep.subr.mxu0 0.0
        %678 = vmatpush1.msra.mxu0 0.0
        %679 = vmatprep.subr.mxu0 0.0
        %680 = vmatpush1.msra.mxu0 0.0
        %681 = vmatprep.subr.mxu0 0.0
        %682 = vmatpush1.msra.mxu0 0.0
        %683 = vmatprep.subr.mxu0 0.0
        %684 = vmatpush1.msra.mxu0 0.0
        %685 = vmatprep.subr.mxu0 0.0
        %686 = vmatpush1.msra.mxu0 0.0
        %687 = vmatprep.subr.mxu0 0.0
        %688 = vmatpush1.msra.mxu0 0.0
        %689 = vmatprep.subr.mxu0 0.0
        %690 = vmatpush1.msra.mxu0 0.0
        %691 = vmatprep.subr.mxu0 0.0
        %692 = vmatpush1.msra.mxu0 0.0
        %693 = vmatprep.subr.mxu0 0.0
        %694 = vmatpush1.msra.mxu0 0.0
        %695 = vmatprep.subr.mxu0 0.0
        %696 = vmatpush1.msra.mxu0 0.0
        %697 = vmatprep.subr.mxu0 0.0
        %698 = vmatpush1.msra.mxu0 0.0
        %699 = vmatprep.subr.mxu0 0.0
        %700 = vmatpush1.msra.mxu0 0.0
        %701 = vmatprep.subr.mxu0 0.0
        %702 = vmatpush1.msra.mxu0 0.0
        %703 = vmatprep.subr.mxu0 0.0
        %704 = vmatpush1.msra.mxu0 0.0
        %705 = vmatprep.subr.mxu0 0.0
        %706 = vmatpush1.msra.mxu0 0.0
        %707 = vmatprep.subr.mxu0 0.0
        %708 = vmatpush1.msra.mxu0 0.0
        %709 = vmatprep.subr.mxu0 0.0
        %710 = vmatpush1.msra.mxu0 0.0
        %711 = vmatprep.subr.mxu0 0.0
        %712 = vmatpush1.msra.mxu0 0.0
        %713 = vmatprep.subr.mxu0 0.0
        %714 = vmatpush1.msra.mxu0 0.0
        %715 = vmatprep.subr.mxu0 0.0
        %716 = vmatpush1.msra.mxu0 0.0
        %717 = vmatprep.subr.mxu0 0.0
        %718 = vmatpush1.msra.mxu0 0.0
        %719 = vmatprep.subr.mxu0 0.0
        %720 = vmatpush1.msra.mxu0 0.0
        %721 = vmatprep.subr.mxu0 0.0
        %722 = vmatpush1.msra.mxu0 0.0
        %723 = vmatprep.mubr.f32.mxu0 0.0
        %724 = vmatmul.mubr.f32.gmra.mrb[0].mxu0 %v653
        %v725 = vpop.f32.mrb[0].mxu0
        %v726 = vadd.f32 %v650, %v725
        %v727 = vpop.f32.mrb[0].mxu0
        %728 = vdwg.mxu0
        %v729 = vsub.f32 0.0, %v726
        %v730 = vmul.f32 %v729, 1.442695
        %v731 = vpow.pop %v730
        %v732 = vadd.f32 %v731, 1.0
        %v733 = vrcp.pop %v732
        %v734 = vmul.f32 1.0, %v733
        %v735 = vld [vmem:[%s10] sm:$0x3]
        %v737 = vlaneseq
        %v738 = vshrl.u32 %v737, 7
        %v739 = vsub.s32 0, %v738
        %v740 = vrot.slane %v735, %v739
        %v741 = vlaneseq
        %v742 = vshrl.u32 %v741, 7
        %v743 = vsub.s32 1, %v742
        %v744 = vrot.slane %v735, %v743
        %vm745 = vcmask 7168
        %v747 = vsel %vm745, %v734, 0
        %vm749 = vcmask 1040384
        %v750 = vsel %vm749, %v740, 0
        %v752 = vsel %vm749, %v744, 0
        %754 = vmatprep.subr.mxu0 %v752
        %755 = vmatpush1.msra.mxu0 %v750
        %756 = vmatprep.subr.mxu0 0.0
        %757 = vmatpush1.msra.mxu0 0.0
        %758 = vmatprep.subr.mxu0 0.0
        %759 = vmatpush1.msra.mxu0 0.0
        %760 = vmatprep.subr.mxu0 0.0
        %761 = vmatpush1.msra.mxu0 0.0
        %762 = vmatprep.subr.mxu0 0.0
        %763 = vmatpush1.msra.mxu0 0.0
        %764 = vmatprep.subr.mxu0 0.0
        %765 = vmatpush1.msra.mxu0 0.0
        %766 = vmatprep.subr.mxu0 0.0
        %767 = vmatpush1.msra.mxu0 0.0
        %768 = vmatprep.subr.mxu0 0.0
        %769 = vmatpush1.msra.mxu0 0.0
        %770 = vmatprep.subr.mxu0 0.0
        %771 = vmatpush1.msra.mxu0 0.0
        %772 = vmatprep.subr.mxu0 0.0
        %773 = vmatpush1.msra.mxu0 0.0
        %774 = vmatprep.subr.mxu0 0.0
        %775 = vmatpush1.msra.mxu0 0.0
        %776 = vmatprep.subr.mxu0 0.0
        %777 = vmatpush1.msra.mxu0 0.0
        %778 = vmatprep.subr.mxu0 0.0
        %779 = vmatpush1.msra.mxu0 0.0
        %780 = vmatprep.subr.mxu0 0.0
        %781 = vmatpush1.msra.mxu0 0.0
        %782 = vmatprep.subr.mxu0 0.0
        %783 = vmatpush1.msra.mxu0 0.0
        %784 = vmatprep.subr.mxu0 0.0
        %785 = vmatpush1.msra.mxu0 0.0
        %786 = vmatprep.subr.mxu0 0.0
        %787 = vmatpush1.msra.mxu0 0.0
        %788 = vmatprep.subr.mxu0 0.0
        %789 = vmatpush1.msra.mxu0 0.0
        %790 = vmatprep.subr.mxu0 0.0
        %791 = vmatpush1.msra.mxu0 0.0
        %792 = vmatprep.subr.mxu0 0.0
        %793 = vmatpush1.msra.mxu0 0.0
        %794 = vmatprep.subr.mxu0 0.0
        %795 = vmatpush1.msra.mxu0 0.0
        %796 = vmatprep.subr.mxu0 0.0
        %797 = vmatpush1.msra.mxu0 0.0
        %798 = vmatprep.subr.mxu0 0.0
        %799 = vmatpush1.msra.mxu0 0.0
        %800 = vmatprep.subr.mxu0 0.0
        %801 = vmatpush1.msra.mxu0 0.0
        %802 = vmatprep.subr.mxu0 0.0
        %803 = vmatpush1.msra.mxu0 0.0
        %804 = vmatprep.subr.mxu0 0.0
        %805 = vmatpush1.msra.mxu0 0.0
        %806 = vmatprep.subr.mxu0 0.0
        %807 = vmatpush1.msra.mxu0 0.0
        %808 = vmatprep.subr.mxu0 0.0
        %809 = vmatpush1.msra.mxu0 0.0
        %810 = vmatprep.subr.mxu0 0.0
        %811 = vmatpush1.msra.mxu0 0.0
        %812 = vmatprep.subr.mxu0 0.0
        %813 = vmatpush1.msra.mxu0 0.0
        %814 = vmatprep.subr.mxu0 0.0
        %815 = vmatpush1.msra.mxu0 0.0
        %816 = vmatprep.subr.mxu0 0.0
        %817 = vmatpush1.msra.mxu0 0.0
        %818 = vmatprep.mubr.f32.mxu0 0.0
        %819 = vmatmul.mubr.f32.gmra.mrb[0].mxu0 %v747
        %v820 = vpop.f32.mrb[0].mxu0
        %v821 = vadd.f32 0.0, %v820
        %v822 = vpop.f32.mrb[0].mxu0
        %v823 = vadd.f32 0.0, %v822
        %824 = vdwg.mxu0
        %v825 = vrot.slane %v468, 4
        %v826 = vmax.f32 %v468, %v825
        %v827 = vrot.slane %v826, 2
        %v828 = vmax.f32 %v826, %v827
        %v829 = vrot.slane %v828, 1
        %v830 = vmax.f32 %v828, %v829
        %v831 = vrot.slane %v469, 4
        %v832 = vmax.f32 %v469, %v831
        %v833 = vrot.slane %v832, 2
        %v834 = vmax.f32 %v832, %v833
        %v835 = vrot.slane %v834, 1
        %v836 = vmax.f32 %v834, %v835
        %v837 = vrot.slane %v468, 4
        %v838 = vadd.f32 %v468, %v837
        %v839 = vrot.slane %v838, 2
        %v840 = vadd.f32 %v838, %v839
        %v841 = vrot.slane %v840, 1
        %v842 = vadd.f32 %v840, %v841
        %v843 = vrot.slane %v469, 4
        %v844 = vadd.f32 %v469, %v843
        %v845 = vrot.slane %v844, 2
        %v846 = vadd.f32 %v844, %v845
        %v847 = vrot.slane %v846, 1
        %v848 = vadd.f32 %v846, %v847
        %v849 = vmul.f32 %v842, 0.125
        %v850 = vmul.f32 %v848, 0.125
        %v851 = vsel %vm749, %v830, %v849
        %v852 = vsel %vm749, %v836, %v850
        %v853 = vld [vmem:[%s11] sm:$0x3]
        %v854 = vld [vmem:[%s12] sm:$0x3]
        %v855 = vadd.s32 %v853, 4294967293
        %vm856 = vcmp.ge.s32.totalorder %v855, 0
        %vm857 = vcmp.lt.s32.totalorder %v855, 16
        %vm858 = vmand %vm856, %vm857
        %861 = vrot.lane.b32.xlu0 %v851, 48
        %v862 = vpop.permute.xlu0 %861
        %863 = vrot.lane.b32.xlu0 %v852, 48
        %v864 = vpop.permute.xlu0 %863
        %vm865 = vcmask 392192
        %v866 = vsel %vm865, %v862, %v864
        %v869 = vsel %vm865, 0.0, %v862
        %v870 = vsel %vm858, 1, 0
        %v871 = vlaneseq
        %v872 = vshrl.u32 %v871, 7
        %v873 = vsub.s32 0, %v872
        %v874 = vrot.slane %v870, %v873
        %v875 = vlaneseq
        %v876 = vshrl.u32 %v875, 7
        %v877 = vsub.s32 1, %v876
        %v878 = vrot.slane %v870, %v877
        %vm879 = vcmp.eq.s32.totalorder %v874, 1
        %vm880 = vcmp.eq.s32.totalorder %v878, 1
        %v881 = vsel %vm879, %v869, 0.0
        %v882 = vsel %vm880, %v866, 0.0
        %v883 = vadd.s32 %v853, 4294967294
        %vm884 = vcmp.ge.s32.totalorder %v883, 0
        %vm885 = vcmp.lt.s32.totalorder %v883, 16
        %vm886 = vmand %vm884, %vm885
        %887 = vrot.lane.b32.xlu0 %v851, 32
        %v888 = vpop.permute.xlu0 %887
        %889 = vrot.lane.b32.xlu0 %v852, 32
        %v890 = vpop.permute.xlu0 %889
        %vm891 = vcmask 261120
        %v892 = vsel %vm891, %v888, %v890
        %v895 = vsel %vm891, 0.0, %v888
        %v896 = vsel %vm886, 1, 0
        %v897 = vlaneseq
        %v898 = vshrl.u32 %v897, 7
        %v899 = vsub.s32 0, %v898
        %v900 = vrot.slane %v896, %v899
        %v901 = vlaneseq
        %v902 = vshrl.u32 %v901, 7
        %v903 = vsub.s32 1, %v902
        %v904 = vrot.slane %v896, %v903
        %vm905 = vcmp.eq.s32.totalorder %v900, 1
        %vm906 = vcmp.eq.s32.totalorder %v904, 1
        %v907 = vsel %vm905, %v895, 0.0
        %v908 = vsel %vm906, %v892, 0.0
        %v909 = vadd.s32 %v853, 4294967295
        %vm910 = vcmp.ge.s32.totalorder %v909, 0
        %vm911 = vcmp.lt.s32.totalorder %v909, 16
        %vm912 = vmand %vm910, %vm911
        %913 = vrot.lane.b32.xlu0 %v851, 16
        %v914 = vpop.permute.xlu0 %913
        %915 = vrot.lane.b32.xlu0 %v852, 16
        %v916 = vpop.permute.xlu0 %915
        %vm917 = vcmask 130048
        %v918 = vsel %vm917, %v914, %v916
        %v921 = vsel %vm917, 0.0, %v914
        %v922 = vsel %vm912, 1, 0
        %v923 = vlaneseq
        %v924 = vshrl.u32 %v923, 7
        %v925 = vsub.s32 0, %v924
        %v926 = vrot.slane %v922, %v925
        %v927 = vlaneseq
        %v928 = vshrl.u32 %v927, 7
        %v929 = vsub.s32 1, %v928
        %v930 = vrot.slane %v922, %v929
        %vm931 = vcmp.eq.s32.totalorder %v926, 1
        %vm932 = vcmp.eq.s32.totalorder %v930, 1
        %v933 = vsel %vm931, %v921, 0.0
        %v934 = vsel %vm932, %v918, 0.0
        %v935 = vadd.s32 %v853, 1
        %vm936 = vcmp.ge.s32.totalorder %v935, 0
        %vm937 = vcmp.lt.s32.totalorder %v935, 16
        %vm938 = vmand %vm936, %vm937
        %939 = vrot.lane.b32.xlu0 %v851, 112
        %v940 = vpop.permute.xlu0 %939
        %941 = vrot.lane.b32.xlu0 %v852, 112
        %v942 = vpop.permute.xlu0 %941
        %vm943 = vcmask 916480
        %v944 = vsel %vm943, %v940, %v942
        %v947 = vsel %vm943, %v942, 0.0
        %v948 = vsel %vm938, 1, 0
        %v949 = vlaneseq
        %v950 = vshrl.u32 %v949, 7
        %v951 = vsub.s32 0, %v950
        %v952 = vrot.slane %v948, %v951
        %v953 = vlaneseq
        %v954 = vshrl.u32 %v953, 7
        %v955 = vsub.s32 1, %v954
        %v956 = vrot.slane %v948, %v955
        %vm957 = vcmp.eq.s32.totalorder %v952, 1
        %vm958 = vcmp.eq.s32.totalorder %v956, 1
        %v959 = vsel %vm957, %v944, 0.0
        %v960 = vsel %vm958, %v947, 0.0
        %v961 = vadd.s32 %v853, 2
        %vm962 = vcmp.ge.s32.totalorder %v961, 0
        %vm963 = vcmp.lt.s32.totalorder %v961, 16
        %vm964 = vmand %vm962, %vm963
        %965 = vrot.lane.b32.xlu0 %v851, 96
        %v966 = vpop.permute.xlu0 %965
        %967 = vrot.lane.b32.xlu0 %v852, 96
        %v968 = vpop.permute.xlu0 %967
        %vm969 = vcmask 785408
        %v970 = vsel %vm969, %v966, %v968
        %v973 = vsel %vm969, %v968, 0.0
        %v974 = vsel %vm964, 1, 0
        %v975 = vlaneseq
        %v976 = vshrl.u32 %v975, 7
        %v977 = vsub.s32 0, %v976
        %v978 = vrot.slane %v974, %v977
        %v979 = vlaneseq
        %v980 = vshrl.u32 %v979, 7
        %v981 = vsub.s32 1, %v980
        %v982 = vrot.slane %v974, %v981
        %vm983 = vcmp.eq.s32.totalorder %v978, 1
        %vm984 = vcmp.eq.s32.totalorder %v982, 1
        %v985 = vsel %vm983, %v970, 0.0
        %v986 = vsel %vm984, %v973, 0.0
        %v987 = vadd.s32 %v853, 3
        %vm988 = vcmp.ge.s32.totalorder %v987, 0
        %vm989 = vcmp.lt.s32.totalorder %v987, 16
        %vm990 = vmand %vm988, %vm989
        %991 = vrot.lane.b32.xlu0 %v851, 80
        %v992 = vpop.permute.xlu0 %991
        %993 = vrot.lane.b32.xlu0 %v852, 80
        %v994 = vpop.permute.xlu0 %993
        %vm995 = vcmask 654336
        %v996 = vsel %vm995, %v992, %v994
        %v999 = vsel %vm995, %v994, 0.0
        %v1000 = vsel %vm990, 1, 0
        %v1001 = vlaneseq
        %v1002 = vshrl.u32 %v1001, 7
        %v1003 = vsub.s32 0, %v1002
        %v1004 = vrot.slane %v1000, %v1003
        %v1005 = vlaneseq
        %v1006 = vshrl.u32 %v1005, 7
        %v1007 = vsub.s32 1, %v1006
        %v1008 = vrot.slane %v1000, %v1007
        %vm1009 = vcmp.eq.s32.totalorder %v1004, 1
        %vm1010 = vcmp.eq.s32.totalorder %v1008, 1
        %v1011 = vsel %vm1009, %v996, 0.0
        %v1012 = vsel %vm1010, %v999, 0.0
        %v1015 = vrot.slane %v907, 6
        %v1016 = vrot.slane %v908, 6
        %v1021 = vrot.slane %v933, 4
        %v1022 = vrot.slane %v934, 4
        %v1025 = vrot.slane %v851, 2
        %v1026 = vrot.slane %v852, 2
        %v1031 = vrot.slane %v985, 6
        %v1032 = vrot.slane %v986, 6
        %v1037 = vrot.slane %v1011, 4
        %v1038 = vrot.slane %v1012, 4
        %v1041 = vsel %vm655, %v881, %v1015
        %v1042 = vsel %vm655, %v882, %v1016
        %vm1043 = vcmask 1043456
        %v1044 = vsel %vm1043, %v1041, %v1021
        %v1045 = vsel %vm1043, %v1042, %v1022
        %vm1046 = vcmask 1045504
        %v1047 = vsel %vm1046, %v1044, %v1025
        %v1048 = vsel %vm1046, %v1045, %v1026
        %v1049 = vsel %vm655, %v959, %v1031
        %v1050 = vsel %vm655, %v960, %v1032
        %v1051 = vsel %vm1043, %v1049, %v1037
        %v1052 = vsel %vm1043, %v1050, %v1038
        %v1053 = vld [vmem:[%s8] sm:$0x7f]
        %vm1054 = vcmask 113664
        %v1056 = vsel %vm1054, %v1053, 0
        %v1059 = vsel %vm1046, %v1051, 0
        %v1062 = vsel %vm1046, %v1052, 0
        %1064 = vmatprep.subr.mxu0 %v1048
        %1065 = vmatpush1.msra.mxu0 %v1047
        %1066 = vmatprep.subr.mxu0 %v1062
        %1067 = vmatpush1.msra.mxu0 %v1059
        %1068 = vmatprep.subr.mxu0 0.0
        %1069 = vmatpush1.msra.mxu0 0.0
        %1070 = vmatprep.subr.mxu0 0.0
        %1071 = vmatpush1.msra.mxu0 0.0
        %1072 = vmatprep.subr.mxu0 0.0
        %1073 = vmatpush1.msra.mxu0 0.0
        %1074 = vmatprep.subr.mxu0 0.0
        %1075 = vmatpush1.msra.mxu0 0.0
        %1076 = vmatprep.subr.mxu0 0.0
        %1077 = vmatpush1.msra.mxu0 0.0
        %1078 = vmatprep.subr.mxu0 0.0
        %1079 = vmatpush1.msra.mxu0 0.0
        %1080 = vmatprep.subr.mxu0 0.0
        %1081 = vmatpush1.msra.mxu0 0.0
        %1082 = vmatprep.subr.mxu0 0.0
        %1083 = vmatpush1.msra.mxu0 0.0
        %1084 = vmatprep.subr.mxu0 0.0
        %1085 = vmatpush1.msra.mxu0 0.0
        %1086 = vmatprep.subr.mxu0 0.0
        %1087 = vmatpush1.msra.mxu0 0.0
        %1088 = vmatprep.subr.mxu0 0.0
        %1089 = vmatpush1.msra.mxu0 0.0
        %1090 = vmatprep.subr.mxu0 0.0
        %1091 = vmatpush1.msra.mxu0 0.0
        %1092 = vmatprep.subr.mxu0 0.0
        %1093 = vmatpush1.msra.mxu0 0.0
        %1094 = vmatprep.subr.mxu0 0.0
        %1095 = vmatpush1.msra.mxu0 0.0
        %1096 = vmatprep.subr.mxu0 0.0
        %1097 = vmatpush1.msra.mxu0 0.0
        %1098 = vmatprep.subr.mxu0 0.0
        %1099 = vmatpush1.msra.mxu0 0.0
        %1100 = vmatprep.subr.mxu0 0.0
        %1101 = vmatpush1.msra.mxu0 0.0
        %1102 = vmatprep.subr.mxu0 0.0
        %1103 = vmatpush1.msra.mxu0 0.0
        %1104 = vmatprep.subr.mxu0 0.0
        %1105 = vmatpush1.msra.mxu0 0.0
        %1106 = vmatprep.subr.mxu0 0.0
        %1107 = vmatpush1.msra.mxu0 0.0
        %1108 = vmatprep.subr.mxu0 0.0
        %1109 = vmatpush1.msra.mxu0 0.0
        %1110 = vmatprep.subr.mxu0 0.0
        %1111 = vmatpush1.msra.mxu0 0.0
        %1112 = vmatprep.subr.mxu0 0.0
        %1113 = vmatpush1.msra.mxu0 0.0
        %1114 = vmatprep.subr.mxu0 0.0
        %1115 = vmatpush1.msra.mxu0 0.0
        %1116 = vmatprep.subr.mxu0 0.0
        %1117 = vmatpush1.msra.mxu0 0.0
        %1118 = vmatprep.subr.mxu0 0.0
        %1119 = vmatpush1.msra.mxu0 0.0
        %1120 = vmatprep.subr.mxu0 0.0
        %1121 = vmatpush1.msra.mxu0 0.0
        %1122 = vmatprep.subr.mxu0 0.0
        %1123 = vmatpush1.msra.mxu0 0.0
        %1124 = vmatprep.subr.mxu0 0.0
        %1125 = vmatpush1.msra.mxu0 0.0
        %1126 = vmatprep.subr.mxu0 0.0
        %1127 = vmatpush1.msra.mxu0 0.0
        %1128 = vmatprep.mubr.f32.mxu0 0.0
        %1129 = vmatmul.mubr.f32.gmra.mrb[0].mxu0 %v1056
        %v1130 = vpop.f32.mrb[0].mxu0
        %v1131 = vadd.f32 0.0, %v1130
        %v1132 = vpop.f32.mrb[0].mxu0
        %v1133 = vadd.f32 0.0, %v1132
        %1134 = vdwg.mxu0
        %v1135 = vadd.s32 %v854, 4294967293
        %vm1136 = vcmp.ge.s32.totalorder %v1135, 0
        %vm1137 = vcmp.lt.s32.totalorder %v1135, 16
        %vm1138 = vmand %vm1136, %vm1137
        %1141 = vrot.lane.b32.xlu0 %v1131, 3
        %v1142 = vpop.permute.xlu0 %1141
        %1143 = vrot.lane.b32.xlu0 %v1133, 3
        %v1144 = vpop.permute.xlu0 %1143
        %vm1145 = vcmask 23552
        %v1146 = vsel %vm1145, %v1142, %v1144
        %v1148 = vsel %vm1145, 0.0, %v1142
        %v1150 = vcombine.low %v1148, %v1146
        %v1152 = vunpack.c.l.s4 1966171168
        %v1153 = vunpack.c.0.s8 %v1152
        %v1154 = vlaneseq
        %v1155 = vshrl.u32 %v1154, 7
        %v1156 = vsub.s32 %v1153, %v1155
        %v1157 = vrot.slane %v1150, %v1156
        %v1159 = vunpack.c.l.s4 1966171168
        %v1160 = vunpack.c.0.s8 %v1159
        %v1161 = vlaneseq
        %v1162 = vshrl.u32 %v1161, 7
        %v1163 = vsub.s32 %v1160, %v1162
        %v1164 = vrot.slane %v1157, %v1163
        %v1166 = vsel %vm1138, %v1164, 0.0
        %v1167 = vadd.s32 %v854, 4294967294
        %vm1168 = vcmp.ge.s32.totalorder %v1167, 0
        %vm1169 = vcmp.lt.s32.totalorder %v1167, 16
        %vm1170 = vmand %vm1168, %vm1169
        %v1171 = vrot.slane %v1131, 1
        %v1172 = vrot.slane %v1133, 1
        %1173 = vrot.lane.b32.xlu0 %v1171, 2
        %v1174 = vpop.permute.xlu0 %1173
        %1175 = vrot.lane.b32.xlu0 %v1172, 2
        %v1176 = vpop.permute.xlu0 %1175
        %v1177 = vsel %vm651, %v1174, %v1176
        %v1179 = vsel %vm651, 0.0, %v1174
        %v1181 = vcombine.low %v1179, %v1177
        %v1183 = vunpack.c.l.s4 1966171168
        %v1184 = vunpack.c.0.s8 %v1183
        %v1185 = vlaneseq
        %v1186 = vshrl.u32 %v1185, 7
        %v1187 = vsub.s32 %v1184, %v1186
        %v1188 = vrot.slane %v1181, %v1187
        %v1190 = vunpack.c.l.s4 1966171168
        %v1191 = vunpack.c.0.s8 %v1190
        %v1192 = vlaneseq
        %v1193 = vshrl.u32 %v1192, 7
        %v1194 = vsub.s32 %v1191, %v1193
        %v1195 = vrot.slane %v1188, %v1194
        %v1197 = vsel %vm1170, %v1195, 0.0
        %v1198 = vadd.f32 %v1166, %v1197
        %v1199 = vadd.s32 %v854, 4294967295
        %vm1200 = vcmp.ge.s32.totalorder %v1199, 0
        %vm1201 = vcmp.lt.s32.totalorder %v1199, 16
        %vm1202 = vmand %vm1200, %vm1201
        %v1203 = vrot.slane %v1131, 2
        %v1204 = vrot.slane %v1133, 2
        %1205 = vrot.lane.b32.xlu0 %v1203, 1
        %v1206 = vpop.permute.xlu0 %1205
        %1207 = vrot.lane.b32.xlu0 %v1204, 1
        %v1208 = vpop.permute.xlu0 %1207
        %v1209 = vsel %vm745, %v1206, %v1208
        %v1211 = vsel %vm745, 0.0, %v1206
        %v1213 = vcombine.low %v1211, %v1209
        %v1215 = vunpack.c.l.s4 1966171168
        %v1216 = vunpack.c.0.s8 %v1215
        %v1217 = vlaneseq
        %v1218 = vshrl.u32 %v1217, 7
        %v1219 = vsub.s32 %v1216, %v1218
        %v1220 = vrot.slane %v1213, %v1219
        %v1222 = vunpack.c.l.s4 1966171168
        %v1223 = vunpack.c.0.s8 %v1222
        %v1224 = vlaneseq
        %v1225 = vshrl.u32 %v1224, 7
        %v1226 = vsub.s32 %v1223, %v1225
        %v1227 = vrot.slane %v1220, %v1226
        %v1229 = vsel %vm1202, %v1227, 0.0
        %v1230 = vadd.f32 %v1198, %v1229
        %v1231 = vcombine.low %v1131, %v1133
        %v1233 = vunpack.c.l.s4 1966171168
        %v1234 = vunpack.c.0.s8 %v1233
        %v1235 = vlaneseq
        %v1236 = vshrl.u32 %v1235, 7
        %v1237 = vsub.s32 %v1234, %v1236
        %v1238 = vrot.slane %v1231, %v1237
        %v1239 = vcombine.high %v1238, %v1238
        %v1241 = vunpack.c.l.s4 1966171168
        %v1242 = vunpack.c.0.s8 %v1241
        %v1243 = vlaneseq
        %v1244 = vshrl.u32 %v1243, 7
        %v1245 = vsub.s32 %v1242, %v1244
        %v1246 = vrot.slane %v1239, %v1245
        %v1247 = vcombine.high %v1246, %v1246
        %v1249 = vadd.f32 %v1230, %v1247
        %v1250 = vadd.s32 %v854, 1
        %vm1251 = vcmp.ge.s32.totalorder %v1250, 0
        %vm1252 = vcmp.lt.s32.totalorder %v1250, 16
        %vm1253 = vmand %vm1251, %vm1252
        %1254 = vrot.lane.b32.xlu0 %v1131, 127
        %v1255 = vpop.permute.xlu0 %1254
        %1256 = vrot.lane.b32.xlu0 %v1133, 127
        %v1257 = vpop.permute.xlu0 %1256
        %vm1258 = vcmask 1039360
        %v1259 = vsel %vm1258, %v1255, %v1257
        %v1261 = vsel %vm1258, %v1257, 0.0
        %v1263 = vcombine.high %v1259, %v1261
        %v1265 = vunpack.c.l.s4 1966171168
        %v1266 = vunpack.c.0.s8 %v1265
        %v1267 = vlaneseq
        %v1268 = vshrl.u32 %v1267, 7
        %v1269 = vsub.s32 %v1266, %v1268
        %v1270 = vrot.slane %v1263, %v1269
        %v1272 = vunpack.c.l.s4 1966171168
        %v1273 = vunpack.c.0.s8 %v1272
        %v1274 = vlaneseq
        %v1275 = vshrl.u32 %v1274, 7
        %v1276 = vsub.s32 %v1273, %v1275
        %v1277 = vrot.slane %v1270, %v1276
        %v1279 = vsel %vm1253, %v1277, 0.0
        %v1280 = vadd.f32 %v1249, %v1279
        %v1281 = vadd.s32 %v854, 2
        %vm1282 = vcmp.ge.s32.totalorder %v1281, 0
        %vm1283 = vcmp.lt.s32.totalorder %v1281, 16
        %vm1284 = vmand %vm1282, %vm1283
        %1285 = vrot.lane.b32.xlu0 %v1131, 126
        %v1286 = vpop.permute.xlu0 %1285
        %1287 = vrot.lane.b32.xlu0 %v1133, 126
        %v1288 = vpop.permute.xlu0 %1287
        %vm1289 = vcmask 1031168
        %v1290 = vsel %vm1289, %v1286, %v1288
        %v1292 = vsel %vm1289, %v1288, 0.0
        %v1294 = vcombine.high %v1290, %v1292
        %v1296 = vunpack.c.l.s4 1966171168
        %v1297 = vunpack.c.0.s8 %v1296
        %v1298 = vlaneseq
        %v1299 = vshrl.u32 %v1298, 7
        %v1300 = vsub.s32 %v1297, %v1299
        %v1301 = vrot.slane %v1294, %v1300
        %v1302 = vcombine.high %v1301, %v1301
        %v1304 = vunpack.c.l.s4 1966171168
        %v1305 = vunpack.c.0.s8 %v1304
        %v1306 = vlaneseq
        %v1307 = vshrl.u32 %v1306, 7
        %v1308 = vsub.s32 %v1305, %v1307
        %v1309 = vrot.slane %v1302, %v1308
        %v1311 = vsel %vm1284, %v1309, 0.0
        %v1312 = vadd.f32 %v1280, %v1311
        %v1313 = vadd.s32 %v854, 3
        %vm1314 = vcmp.ge.s32.totalorder %v1313, 0
        %vm1315 = vcmp.lt.s32.totalorder %v1313, 16
        %vm1316 = vmand %vm1314, %vm1315
        %1317 = vrot.lane.b32.xlu0 %v1131, 125
        %v1318 = vpop.permute.xlu0 %1317
        %1319 = vrot.lane.b32.xlu0 %v1133, 125
        %v1320 = vpop.permute.xlu0 %1319
        %vm1321 = vcmask 1022976
        %v1322 = vsel %vm1321, %v1318, %v1320
        %v1324 = vsel %vm1321, %v1320, 0.0
        %v1326 = vcombine.high %v1322, %v1324
        %v1328 = vunpack.c.l.s4 1966171168
        %v1329 = vunpack.c.0.s8 %v1328
        %v1330 = vlaneseq
        %v1331 = vshrl.u32 %v1330, 7
        %v1332 = vsub.s32 %v1329, %v1331
        %v1333 = vrot.slane %v1326, %v1332
        %v1335 = vunpack.c.l.s4 1966171168
        %v1336 = vunpack.c.0.s8 %v1335
        %v1337 = vlaneseq
        %v1338 = vshrl.u32 %v1337, 7
        %v1339 = vsub.s32 %v1336, %v1338
        %v1340 = vrot.slane %v1333, %v1339
        %v1341 = vcombine.high %v1340, %v1340
        %v1343 = vsel %vm1316, %v1341, 0.0
        %v1344 = vadd.f32 %v1312, %v1343
        %v1345 = vsub.f32 0.0, %v1344
        %v1346 = vmul.f32 %v1345, 1.442695
        %v1347 = vpow.pop %v1346
        %v1348 = vadd.f32 %v1347, 1.0
        %v1349 = vrcp.pop %v1348
        %v1350 = vmul.f32 1.0, %v1349
        %v1351 = vmul.f32 %v821, %v468
        %v1352 = vmul.f32 %v823, %v469
        %v1354 = vlaneseq
        %v1355 = vshrl.u32 %v1354, 7
        %v1356 = vsub.s32 0, %v1355
        %v1357 = vrot.slane %v1350, %v1356
        %v1358 = vlaneseq
        %v1359 = vshrl.u32 %v1358, 7
        %v1360 = vsub.s32 1, %v1359
        %v1361 = vrot.slane %v1350, %v1360
        %v1364 = vmul.f32 %v1357, %v468
        %v1365 = vmul.f32 %v1361, %v469
        %v1366 = vld [vmem:[%s2] sm:$0xff]
        %v1367 = vld [vmem:[%s3] sm:$0xff]
        %1369 = vset.pattern.permute.xlu0 0
        %1370 = vperm.xlu0 %1369, %v1367
        %v1371 = vpop.permute.xlu0 %1370
        %vm1373 = vcmask 195584
        %v1375 = vsel %vm1373, %v1366, 0
        %1377 = vmatprep.subr.mxu0 %v469
        %1378 = vmatpush1.msra.mxu0 %v468
        %1379 = vmatprep.subr.mxu0 %v1352
        %1380 = vmatpush1.msra.mxu0 %v1351
        %1381 = vmatprep.subr.mxu0 %v1365
        %1382 = vmatpush1.msra.mxu0 %v1364
        %1383 = vmatprep.subr.mxu0 0.0
        %1384 = vmatpush1.msra.mxu0 0.0
        %1385 = vmatprep.subr.mxu0 0.0
        %1386 = vmatpush1.msra.mxu0 0.0
        %1387 = vmatprep.subr.mxu0 0.0
        %1388 = vmatpush1.msra.mxu0 0.0
        %1389 = vmatprep.subr.mxu0 0.0
        %1390 = vmatpush1.msra.mxu0 0.0
        %1391 = vmatprep.subr.mxu0 0.0
        %1392 = vmatpush1.msra.mxu0 0.0
        %1393 = vmatprep.subr.mxu0 0.0
        %1394 = vmatpush1.msra.mxu0 0.0
        %1395 = vmatprep.subr.mxu0 0.0
        %1396 = vmatpush1.msra.mxu0 0.0
        %1397 = vmatprep.subr.mxu0 0.0
        %1398 = vmatpush1.msra.mxu0 0.0
        %1399 = vmatprep.subr.mxu0 0.0
        %1400 = vmatpush1.msra.mxu0 0.0
        %1401 = vmatprep.subr.mxu0 0.0
        %1402 = vmatpush1.msra.mxu0 0.0
        %1403 = vmatprep.subr.mxu0 0.0
        %1404 = vmatpush1.msra.mxu0 0.0
        %1405 = vmatprep.subr.mxu0 0.0
        %1406 = vmatpush1.msra.mxu0 0.0
        %1407 = vmatprep.subr.mxu0 0.0
        %1408 = vmatpush1.msra.mxu0 0.0
        %1409 = vmatprep.subr.mxu0 0.0
        %1410 = vmatpush1.msra.mxu0 0.0
        %1411 = vmatprep.subr.mxu0 0.0
        %1412 = vmatpush1.msra.mxu0 0.0
        %1413 = vmatprep.subr.mxu0 0.0
        %1414 = vmatpush1.msra.mxu0 0.0
        %1415 = vmatprep.subr.mxu0 0.0
        %1416 = vmatpush1.msra.mxu0 0.0
        %1417 = vmatprep.subr.mxu0 0.0
        %1418 = vmatpush1.msra.mxu0 0.0
        %1419 = vmatprep.subr.mxu0 0.0
        %1420 = vmatpush1.msra.mxu0 0.0
        %1421 = vmatprep.subr.mxu0 0.0
        %1422 = vmatpush1.msra.mxu0 0.0
        %1423 = vmatprep.subr.mxu0 0.0
        %1424 = vmatpush1.msra.mxu0 0.0
        %1425 = vmatprep.subr.mxu0 0.0
        %1426 = vmatpush1.msra.mxu0 0.0
        %1427 = vmatprep.subr.mxu0 0.0
        %1428 = vmatpush1.msra.mxu0 0.0
        %1429 = vmatprep.subr.mxu0 0.0
        %1430 = vmatpush1.msra.mxu0 0.0
        %1431 = vmatprep.subr.mxu0 0.0
        %1432 = vmatpush1.msra.mxu0 0.0
        %1433 = vmatprep.subr.mxu0 0.0
        %1434 = vmatpush1.msra.mxu0 0.0
        %1435 = vmatprep.subr.mxu0 0.0
        %1436 = vmatpush1.msra.mxu0 0.0
        %1437 = vmatprep.subr.mxu0 0.0
        %1438 = vmatpush1.msra.mxu0 0.0
        %1439 = vmatprep.subr.mxu0 0.0
        %1440 = vmatpush1.msra.mxu0 0.0
        %1441 = vmatprep.mubr.f32.mxu0 0.0
        %1442 = vmatmul.mubr.f32.gmra.mrb[0].mxu0 %v1375
        %v1443 = vpop.f32.mrb[0].mxu0
        %v1444 = vadd.f32 %v1371, %v1443
        %v1445 = vpop.f32.mrb[0].mxu0
        %v1446 = vadd.f32 %v1371, %v1445
        %1447 = vdwg.mxu0
        %1448 = vst [vmem:[%s450] sm:$0xff] %v1444
        %1449 = vst [vmem:[%s450 + $0x8] sm:$0xff] %v1446
        %s1450 = sand.u32 %s318, 1
        %s1451 = scalar_lea.sflag [#allocation3], %s1450
        %s1452 = sand.u32 %s318, 1
        %s1453 = smul.addr %s1452, 16
        %s1454 = scalar_lea.vmem [#allocation2], %s1453
        // Predicated region
        $region73: #{tpu_custom_call.1} parent=71 // pred_check
          %p1455 = pneg %p328
        $region74: #{tpu_custom_call.1} parent=71 // pred_check_branch
          %1457 = sbr.rel (%p1455) target = $region76
        $region75: #{tpu_custom_call.1} parent=71 // pred_region
          %s1458 = smul.u32 2, %s27
          %s1460 = ssub.s32 256, 256
          %1461 = vsyncadd %s1451, %s1460
          %s1462 = smul.addr %s1458, 128
          %s1463 = scalar_lea.hbm %s13, %s1462
          %s1465 = sshll.u32 %s1454, 4
          %s1466 = int_to_ptr.vmem [resolvable:$true] %s1465
          %1468 = dma.vmem_to_hbm [thread:$0]  %s1466, 256, %s1463, %s1451
        $region76: #{tpu_custom_call.1} parent=71 // pred_fallthru
          _
      $region72: #{tpu_custom_call.1} parent=5 // pred_fallthru
        _
      %p1469 = scmp.le.s32.totalorder 2, %s22
      // Predicated region
      $region77: #{tpu_custom_call.1} parent=5 // pred_check
        %p1470 = pneg %p1469
      $region78: #{tpu_custom_call.1} parent=5 // pred_check_branch
        %1472 = sbr.rel (%p1470) target = $region80
      $region79: #{tpu_custom_call.1} parent=5 // pred_region
        %s1473 = ssub.s32 %s22, 2
        // Predicated region
        $region81: #{tpu_custom_call.1} parent=79 // pred_check
          %p1474 = pneg %p334
        $region82: #{tpu_custom_call.1} parent=79 // pred_check_branch
          %1476 = sbr.rel (%p1474) target = $region84
        $region83: #{tpu_custom_call.1} parent=79 // pred_region
          %s1477 = sand.u32 %s319, 1
          %s1478 = scalar_lea.sflag [#allocation3], %s1477
          %s1479 = sand.u32 %s319, 1
          %s1480 = smul.addr %s1479, 16
          %s1481 = scalar_lea.vmem [#allocation2], %s1480
          %1482 = dma.done %s1478, 256
        $region84: #{tpu_custom_call.1} parent=79 // pred_fallthru
          _
      $region80: #{tpu_custom_call.1} parent=5 // pred_fallthru
        _
    $region6: #{tpu_custom_call.1} parent=1 // loop_footer
      %s26 = sadd.s32 1, %s22
    $region7: #{tpu_custom_call.1} parent=1 // loop_footer_branch
      %21 = sbr.rel target = $region3
    $region8: #{tpu_custom_call.1} parent=1 // loop_exit
      _
    %1483 = vsyncpa [#allocation3], 1
    %s1484 = scalar_lea.sflag [#allocation3], 1
    %1485 = vsyncpa %s1484, 1

</llo_original>
